<compile_context>
chip_gen: v7x
topology: tpu7x:2x2x1
jax: 0.10.0
libtpu: 0.0.40
codegen_flags: <defaults>
</compile_context>

<pallas_src>
import math
from functools import partial

import jax
import jax.numpy as jnp
from jax.experimental import pallas as pl
from jax.experimental.pallas import tpu as pltpu

EPS = 1e-5  # PyTorch LayerNorm default eps

# rows of the packed (12, d_model) per-feature vector array
_LN1_G, _LN1_B, _LN2_G, _LN2_B, _LN3_G, _LN3_B = 0, 1, 2, 3, 4, 5
_RED_B, _BQ, _BK, _BV, _BO, _BPROJ = 6, 7, 8, 9, 10, 11


# ----------------------------- kernel helpers -----------------------------

def _layernorm(x, g, b):
    mu = jnp.mean(x, axis=-1, keepdims=True)
    var = jnp.mean((x - mu) ** 2, axis=-1, keepdims=True)
    return (x - mu) * jax.lax.rsqrt(var + EPS) * g + b


def _mm(a, w_bf16):
    """bf16 MXU matmul with f32 accumulation (weights arrive pre-cast)."""
    return jnp.dot(a.astype(jnp.bfloat16), w_bf16,
                   preferred_element_type=jnp.float32)


# ------------------------------- fused kernel ------------------------------

def extractor_kernel(
        x_ref, y_ref,                      # activations (f32)
        vq_ref, vd_ref, bfc_ref,           # packed LN params / biases (f32)
        red_w_ref, wq_ref, wkv_ref, wo_ref, w_fc_ref, w_proj_ref,  # bf16 weights
        o_ref,                             # output
        attn_sc,                           # VMEM scratch (nb*tx, D) f32
        *, n_head, nb, tx, ty):
    """One grid step = nb batch elements. Entire Extractor forward in VMEM."""
    f32 = jnp.float32
    D = wq_ref.shape[0]
    H = n_head
    hd = D // H
    scale = 1.0 / math.sqrt(hd)

    def row(ref, r):
        return ref[r:r + 1, :]             # (1, width) — broadcasts over rows

    x = x_ref[...]                         # (nb*tx, qdim) f32
    y = y_ref[...]                         # (nb*ty, D)    f32

    # ---- x = reduction(ln_0(x)) ----
    x2 = _mm(_layernorm(x, row(vq_ref, 0), row(vq_ref, 1)), red_w_ref[...]) \
        + row(vd_ref, _RED_B)              # (nb*tx, D)

    # ---- projections with ln_2 / ln_3 fused in ----
    xn = _layernorm(x2, row(vd_ref, _LN2_G), row(vd_ref, _LN2_B))
    yn = _layernorm(y, row(vd_ref, _LN3_G), row(vd_ref, _LN3_B))
    q = _mm(xn, wq_ref[...]) + row(vd_ref, _BQ)      # (nb*tx, D)
    kv = _mm(yn, wkv_ref[...])                       # (nb*ty, 2D)
    k = kv[:, :D] + row(vd_ref, _BK)
    v = kv[:, D:] + row(vd_ref, _BV)

    # ---- per-(batch, head) attention: tiny matmuls kept in f32.  Each head's
    # output is scattered into the scratch so out_proj is ONE full-K matmul.
    for b in range(nb):
        rq = slice(b * tx, (b + 1) * tx)
        rk = slice(b * ty, (b + 1) * ty)
        for h in range(H):
            c = slice(h * hd, (h + 1) * hd)
            s = jax.lax.dot_general(q[rq, c], k[rk, c],
                                    (((1,), (1,)), ((), ())),
                                    preferred_element_type=f32) * scale
            s = s - jnp.max(s, axis=-1, keepdims=True)
            p = jnp.exp(s)
            p = p / jnp.sum(p, axis=-1, keepdims=True)   # exact normalization
            attn_sc[rq, c] = jnp.dot(p, v[rk, c], preferred_element_type=f32)

    # ---- residual + out_proj (single full-K matmul) ----
    x3 = x2 + _mm(attn_sc[...], wo_ref[...]) + row(vd_ref, _BO)

    # ---- x = x + mlp(ln_1(x)) ----
    h1 = _mm(_layernorm(x3, row(vd_ref, _LN1_G), row(vd_ref, _LN1_B)),
             w_fc_ref[...]) + bfc_ref[...]            # (nb*tx, d_mlp)
    h1 = h1 * jax.nn.sigmoid(1.702 * h1)              # QuickGELU
    x4 = x3 + _mm(h1, w_proj_ref[...]) + row(vd_ref, _BPROJ)

    o_ref[...] = x4.astype(o_ref.dtype)


# ------------------------------- wrapper ------------------------------------

def extractor_forward(params, x, y, *, n_head, batch_block=None):
    """x: (Tx, N, qdim), y: (Ty, N, d_model) -> (Tx, N, d_model)."""
    Tx, N, qdim = x.shape
    Ty, _, d_model = y.shape
    d_mlp = params["w_fc"].shape[1]
    assert d_model % n_head == 0

    # batch elements per grid step: cover the whole (small) batch in one step,
    # otherwise aim for >=128 matmul rows per step; must divide N.
    if batch_block is None:
        batch_block = min(N, max(1, -(-128 // Tx)))
        while N % batch_block:
            batch_block -= 1
    nb = batch_block
    grid_n = N // nb

    # sequence-first -> batch-first once, then flatten to 2-D row slabs so all
    # dense math inside the kernel runs at M = nb*Tx rows (tiny one-time op).
    xb = jnp.transpose(x, (1, 0, 2)).reshape(N * Tx, qdim).astype(jnp.float32)
    yb = jnp.transpose(y, (1, 0, 2)).reshape(N * Ty, d_model).astype(jnp.float32)

    # pack all (1, d_model)-shaped vectors into one array (fewer inputs/DMAs)
    vd = jnp.concatenate([
        params["ln1_g"], params["ln1_b"], params["ln2_g"], params["ln2_b"],
        params["ln3_g"], params["ln3_b"], params["red_b"], params["bq"],
        params["bkv"][:, :d_model], params["bkv"][:, d_model:],
        params["bo"], params["b_proj"]], axis=0).astype(jnp.float32)
    vq = jnp.concatenate([params["ln0_g"], params["ln0_b"]], axis=0)
    bfc = params["b_fc"].astype(jnp.float32)
    weights = [params[k].astype(jnp.bfloat16)
               for k in ("red_w", "wq", "wkv", "wo", "w_fc", "w_proj")]

    def _const_spec(w):
        nd = w.ndim
        return pl.BlockSpec(w.shape, lambda i, _nd=nd: (0,) * _nd)

    # advisory cost estimate for the XLA scheduler
    flops = 2 * N * (Tx * qdim * d_model          # reduction
                     + Tx * d_model * d_model     # q proj
                     + Ty * d_model * 2 * d_model  # k||v proj
                     + 2 * Tx * Ty * d_model      # scores + weighted sum
                     + Tx * d_model * d_model     # out_proj
                     + 2 * Tx * d_model * d_mlp)  # mlp
    transcendentals = N * (n_head * Tx * Ty + Tx * d_mlp)
    bytes_accessed = (4 * (xb.size + yb.size + N * Tx * d_model
                           + vd.size + vq.size + bfc.size)
                      + 2 * sum(w.size for w in weights))

    # explicit scoped-VMEM limit from the (bf16-weight) footprint, with
    # headroom, capped at the v7x-safe 64 MiB.
    footprint = (2 * (nb * Tx * qdim + nb * Ty * d_model + nb * Tx * d_model) * 4
                 + 2 * sum(w.size * 2 for w in weights)
                 + 2 * (vd.size + vq.size + bfc.size) * 4
                 + nb * Tx * d_model * 4)
    vmem_limit = int(min(64 << 20, max(16 << 20, 4 * footprint)))

    out = pl.pallas_call(
        partial(extractor_kernel, n_head=n_head, nb=nb, tx=Tx, ty=Ty),
        out_shape=jax.ShapeDtypeStruct((N * Tx, d_model), jnp.float32),
        grid=(grid_n,),
        in_specs=[
            pl.BlockSpec((nb * Tx, qdim), lambda i: (i, 0)),
            pl.BlockSpec((nb * Ty, d_model), lambda i: (i, 0)),
            _const_spec(vq), _const_spec(vd), _const_spec(bfc),
            *[_const_spec(w) for w in weights],
        ],
        out_specs=pl.BlockSpec((nb * Tx, d_model), lambda i: (i, 0)),
        scratch_shapes=[pltpu.VMEM((nb * Tx, d_model), jnp.float32)],
        compiler_params=pltpu.CompilerParams(
            dimension_semantics=("parallel",),
            vmem_limit_bytes=vmem_limit),
        cost_estimate=pl.CostEstimate(
            flops=int(flops),
            transcendentals=int(transcendentals),
            bytes_accessed=int(bytes_accessed)),
    )(xb, yb, vq, vd, bfc, *weights)

    return jnp.transpose(out.reshape(N, Tx, d_model), (1, 0, 2))


# ------------------------------ parameters ----------------------------------

def _xavier(key, shape):
    fan_in, fan_out = shape
    limit = math.sqrt(6.0 / (fan_in + fan_out))
    return jax.random.uniform(key, shape, jnp.float32, -limit, limit)


def init_params(key, d_model, n_head, qdim, mlp_factor=4.0):
    del n_head  # only used statically by the forward wrapper
    d_mlp = round(mlp_factor * d_model)
    ks = jax.random.split(key, 16)
    wk = _xavier(ks[3], (d_model, d_model))
    wv = _xavier(ks[4], (d_model, d_model))
    bk = 0.02 * jax.random.normal(ks[6], (1, d_model), jnp.float32)
    bv = 0.02 * jax.random.normal(ks[7], (1, d_model), jnp.float32)
    return {
        # LayerNorms (PyTorch default: weight=1, bias=0), stored as (1, D) rows
        "ln0_g": jnp.ones((1, qdim), jnp.float32),
        "ln0_b": jnp.zeros((1, qdim), jnp.float32),
        "ln1_g": jnp.ones((1, d_model), jnp.float32),
        "ln1_b": jnp.zeros((1, d_model), jnp.float32),
        "ln2_g": jnp.ones((1, d_model), jnp.float32),
        "ln2_b": jnp.zeros((1, d_model), jnp.float32),
        "ln3_g": jnp.ones((1, d_model), jnp.float32),
        "ln3_b": jnp.zeros((1, d_model), jnp.float32),
        # reduction: Linear(qdim, d_model), weight stored transposed
        "red_w": _xavier(ks[0], (qdim, d_model)),
        "red_b": 0.02 * jax.random.normal(ks[1], (1, d_model), jnp.float32),
        # attention projections (stored transposed); K||V fused into one matmul
        "wq": _xavier(ks[2], (d_model, d_model)),
        "bq": 0.02 * jax.random.normal(ks[5], (1, d_model), jnp.float32),
        "wkv": jnp.concatenate([wk, wv], axis=1),
        "bkv": jnp.concatenate([bk, bv], axis=1),
        # out_proj / c_proj: random instead of PyTorch zero-init (documented)
        "wo": _xavier(ks[8], (d_model, d_model)),
        "bo": 0.02 * jax.random.normal(ks[9], (1, d_model), jnp.float32),
        "w_fc": _xavier(ks[10], (d_model, d_mlp)),
        "b_fc": 0.02 * jax.random.normal(ks[11], (1, d_mlp), jnp.float32),
        "w_proj": _xavier(ks[12], (d_mlp, d_model)),
        "b_proj": 0.02 * jax.random.normal(ks[13], (1, d_model), jnp.float32),
    }


# ---------------------------- pure-JAX reference -----------------------------

def _reference_forward(params, x, y, n_head):
    def ln(t, g, b):
        mu = t.mean(-1, keepdims=True)
        var = ((t - mu) ** 2).mean(-1, keepdims=True)
        return (t - mu) / jnp.sqrt(var + EPS) * g + b

    d_model = params["wq"].shape[0]
    hd = d_model // n_head
    x2 = ln(x, params["ln0_g"][0], params["ln0_b"][0]) @ params["red_w"] + params["red_b"][0]
    xn = ln(x2, params["ln2_g"][0], params["ln2_b"][0])
    yn = ln(y, params["ln3_g"][0], params["ln3_b"][0])
    q = xn @ params["wq"] + params["bq"][0]
    kv = yn @ params["wkv"] + params["bkv"][0]
    k, v = kv[..., :d_model], kv[..., d_model:]
    Tx, N, _ = q.shape
    Ty = k.shape[0]
    qh = q.reshape(Tx, N, n_head, hd).transpose(1, 2, 0, 3)
    kh = k.reshape(Ty, N, n_head, hd).transpose(1, 2, 0, 3)
    vh = v.reshape(Ty, N, n_head, hd).transpose(1, 2, 0, 3)
    aff = jax.nn.softmax(qh @ kh.transpose(0, 1, 3, 2) / math.sqrt(hd), axis=-1)
    o = (aff @ vh).transpose(2, 0, 1, 3).reshape(Tx, N, d_model)
    x3 = x2 + (o @ params["wo"] + params["bo"][0])
    h1 = ln(x3, params["ln1_g"][0], params["ln1_b"][0]) @ params["w_fc"] + params["b_fc"][0]
    h1 = h1 * jax.nn.sigmoid(1.702 * h1)
    return x3 + (h1 @ params["w_proj"] + params["b_proj"][0])


# --------------------------------- main -------------------------------------

if __name__ == "__main__":
    d_model, n_head, qdim, t_size = 32, 4, 48, 8
    Tx, Ty, N = 8, 16, 2   # query tokens, key/value tokens, batch

    root = jax.random.PRNGKey(0)
    k_param, k_x, k_y = jax.random.split(root, 3)

    params = init_params(k_param, d_model, n_head, qdim)
    x = jax.random.normal(k_x, (Tx, N, qdim), jnp.float32)
    y = jax.random.normal(k_y, (Ty, N, d_model), jnp.float32)

    fwd = jax.jit(partial(extractor_forward, n_head=n_head))
    out = jax.block_until_ready(fwd(params, x, y))
    assert out.shape == (Tx, N, d_model)

    # Tolerance accounts for bf16 MXU matmuls (weights + LHS activations in
    # bf16, f32 accumulation) versus the all-f32 reference.
    ref = _reference_forward(params, x, y, n_head)
    assert bool(jnp.allclose(out, ref, rtol=3e-2, atol=3e-2)), "mismatch vs reference"

    print("KERNEL_OK")
</pallas_src>

<mosaic_0001>
module attributes {stable_mosaic.version = 11 : i64} {
  func.func @extractor_kernel(%arg0: i32, %arg1: memref<16x48xf32, #tpu.memory_space<vmem>>, %arg2: memref<32x32xf32, #tpu.memory_space<vmem>>, %arg3: memref<2x48xf32, #tpu.memory_space<vmem>>, %arg4: memref<12x32xf32, #tpu.memory_space<vmem>>, %arg5: memref<1x128xf32, #tpu.memory_space<vmem>>, %arg6: memref<48x32xbf16, #tpu.memory_space<vmem>>, %arg7: memref<32x32xbf16, #tpu.memory_space<vmem>>, %arg8: memref<32x64xbf16, #tpu.memory_space<vmem>>, %arg9: memref<32x32xbf16, #tpu.memory_space<vmem>>, %arg10: memref<32x128xbf16, #tpu.memory_space<vmem>>, %arg11: memref<128x32xbf16, #tpu.memory_space<vmem>>, %arg12: memref<16x32xf32, #tpu.memory_space<vmem>>, %arg13: memref<16x32xf32, #tpu.memory_space<vmem>>) attributes {dimension_semantics = [#tpu.dimension_semantics<parallel>], iteration_bounds = array<i64: 1>, scalar_prefetch = 0 : i64, scratch_operands = 1 : i64, tpu.core_type = #tpu.core_type<tc>, window_params = [{transform_indices = @transform_0, window_bounds = array<i64: 16, 48>}, {transform_indices = @transform_1, window_bounds = array<i64: 32, 32>}, {pipeline_mode = #tpu.pipeline_mode<synchronous>, transform_indices = @transform_2, window_bounds = array<i64: 2, 48>}, {pipeline_mode = #tpu.pipeline_mode<synchronous>, transform_indices = @transform_3, window_bounds = array<i64: 12, 32>}, {pipeline_mode = #tpu.pipeline_mode<synchronous>, transform_indices = @transform_4, window_bounds = array<i64: 1, 128>}, {pipeline_mode = #tpu.pipeline_mode<synchronous>, transform_indices = @transform_5, window_bounds = array<i64: 48, 32>}, {pipeline_mode = #tpu.pipeline_mode<synchronous>, transform_indices = @transform_6, window_bounds = array<i64: 32, 32>}, {pipeline_mode = #tpu.pipeline_mode<synchronous>, transform_indices = @transform_7, window_bounds = array<i64: 32, 64>}, {pipeline_mode = #tpu.pipeline_mode<synchronous>, transform_indices = @transform_8, window_bounds = array<i64: 32, 32>}, {pipeline_mode = #tpu.pipeline_mode<synchronous>, transform_indices = @transform_9, window_bounds = array<i64: 32, 128>}, {pipeline_mode = #tpu.pipeline_mode<synchronous>, transform_indices = @transform_10, window_bounds = array<i64: 128, 32>}, {transform_indices = @transform_11, window_bounds = array<i64: 16, 32>}]} {
    %c0 = arith.constant 0 : index
    %c0_0 = arith.constant 0 : index
    %0 = vector.load %arg1[%c0, %c0_0] : memref<16x48xf32, #tpu.memory_space<vmem>>, vector<16x48xf32>
    %c0_1 = arith.constant 0 : index
    %c0_2 = arith.constant 0 : index
    %1 = vector.load %arg2[%c0_1, %c0_2] : memref<32x32xf32, #tpu.memory_space<vmem>>, vector<32x32xf32>
    %c0_3 = arith.constant 0 : index
    %c0_4 = arith.constant 0 : index
    %2 = vector.load %arg3[%c0_3, %c0_4] : memref<2x48xf32, #tpu.memory_space<vmem>>, vector<1x48xf32>
    %c1 = arith.constant 1 : index
    %c0_5 = arith.constant 0 : index
    %3 = vector.load %arg3[%c1, %c0_5] : memref<2x48xf32, #tpu.memory_space<vmem>>, vector<1x48xf32>
    %cst = arith.constant dense<0.000000e+00> : vector<16xf32>
    %4 = vector.multi_reduction <add>, %0, %cst [1] : vector<16x48xf32> to vector<16xf32>
    %5 = vector.shape_cast %4 : vector<16xf32> to vector<16x1xf32>
    %cst_6 = arith.constant 4.800000e+01 : f32
    %6 = vector.broadcast %cst_6 : f32 to vector<16x1xf32>
    %7 = arith.divf %5, %6 : vector<16x1xf32>
    %8 = vector.broadcast %7 : vector<16x1xf32> to vector<16x48xf32>
    %9 = arith.subf %0, %8 : vector<16x48xf32>
    %10 = arith.mulf %9, %9 : vector<16x48xf32>
    %cst_7 = arith.constant dense<0.000000e+00> : vector<16xf32>
    %11 = vector.multi_reduction <add>, %10, %cst_7 [1] : vector<16x48xf32> to vector<16xf32>
    %12 = vector.shape_cast %11 : vector<16xf32> to vector<16x1xf32>
    %cst_8 = arith.constant 4.800000e+01 : f32
    %13 = vector.broadcast %cst_8 : f32 to vector<16x1xf32>
    %14 = arith.divf %12, %13 : vector<16x1xf32>
    %15 = vector.broadcast %7 : vector<16x1xf32> to vector<16x48xf32>
    %16 = arith.subf %0, %15 : vector<16x48xf32>
    %cst_9 = arith.constant 9.99999974E-6 : f32
    %17 = vector.broadcast %cst_9 : f32 to vector<16x1xf32>
    %18 = arith.addf %14, %17 : vector<16x1xf32>
    %19 = math.rsqrt %18 : vector<16x1xf32>
    %20 = vector.broadcast %19 : vector<16x1xf32> to vector<16x48xf32>
    %21 = arith.mulf %16, %20 : vector<16x48xf32>
    %22 = vector.broadcast %2 : vector<1x48xf32> to vector<16x48xf32>
    %23 = arith.mulf %21, %22 : vector<16x48xf32>
    %24 = vector.broadcast %3 : vector<1x48xf32> to vector<16x48xf32>
    %25 = arith.addf %23, %24 : vector<16x48xf32>
    %c0_10 = arith.constant 0 : index
    %c0_11 = arith.constant 0 : index
    %26 = vector.load %arg6[%c0_10, %c0_11] : memref<48x32xbf16, #tpu.memory_space<vmem>>, vector<48x32xbf16>
    %27 = arith.truncf %25 : vector<16x48xf32> to vector<16x48xbf16>
    %cst_12 = arith.constant dense<0.000000e+00> : vector<16x32xf32>
    %28 = tpu.matmul %27, %26, %cst_12 {dimension_numbers = #tpu.dot_dimension_numbers<[1], [0], [0], [1], [0, 0, 1, 1], [], []>} : vector<16x48xbf16>, vector<48x32xbf16>, vector<16x32xf32> -> vector<16x32xf32>
    %c6 = arith.constant 6 : index
    %c0_13 = arith.constant 0 : index
    %29 = vector.load %arg4[%c6, %c0_13] : memref<12x32xf32, #tpu.memory_space<vmem>>, vector<1x32xf32>
    %30 = vector.broadcast %29 : vector<1x32xf32> to vector<16x32xf32>
    %31 = arith.addf %28, %30 : vector<16x32xf32>
    %c2 = arith.constant 2 : index
    %c0_14 = arith.constant 0 : index
    %32 = vector.load %arg4[%c2, %c0_14] : memref<12x32xf32, #tpu.memory_space<vmem>>, vector<1x32xf32>
    %c3 = arith.constant 3 : index
    %c0_15 = arith.constant 0 : index
    %33 = vector.load %arg4[%c3, %c0_15] : memref<12x32xf32, #tpu.memory_space<vmem>>, vector<1x32xf32>
    %cst_16 = arith.constant dense<0.000000e+00> : vector<16xf32>
    %34 = vector.multi_reduction <add>, %31, %cst_16 [1] : vector<16x32xf32> to vector<16xf32>
    %35 = vector.shape_cast %34 : vector<16xf32> to vector<16x1xf32>
    %cst_17 = arith.constant 3.200000e+01 : f32
    %36 = vector.broadcast %cst_17 : f32 to vector<16x1xf32>
    %37 = arith.divf %35, %36 : vector<16x1xf32>
    %38 = vector.broadcast %37 : vector<16x1xf32> to vector<16x32xf32>
    %39 = arith.subf %31, %38 : vector<16x32xf32>
    %40 = arith.mulf %39, %39 : vector<16x32xf32>
    %cst_18 = arith.constant dense<0.000000e+00> : vector<16xf32>
    %41 = vector.multi_reduction <add>, %40, %cst_18 [1] : vector<16x32xf32> to vector<16xf32>
    %42 = vector.shape_cast %41 : vector<16xf32> to vector<16x1xf32>
    %cst_19 = arith.constant 3.200000e+01 : f32
    %43 = vector.broadcast %cst_19 : f32 to vector<16x1xf32>
    %44 = arith.divf %42, %43 : vector<16x1xf32>
    %45 = vector.broadcast %37 : vector<16x1xf32> to vector<16x32xf32>
    %46 = arith.subf %31, %45 : vector<16x32xf32>
    %cst_20 = arith.constant 9.99999974E-6 : f32
    %47 = vector.broadcast %cst_20 : f32 to vector<16x1xf32>
    %48 = arith.addf %44, %47 : vector<16x1xf32>
    %49 = math.rsqrt %48 : vector<16x1xf32>
    %50 = vector.broadcast %49 : vector<16x1xf32> to vector<16x32xf32>
    %51 = arith.mulf %46, %50 : vector<16x32xf32>
    %52 = vector.broadcast %32 : vector<1x32xf32> to vector<16x32xf32>
    %53 = arith.mulf %51, %52 : vector<16x32xf32>
    %54 = vector.broadcast %33 : vector<1x32xf32> to vector<16x32xf32>
    %55 = arith.addf %53, %54 : vector<16x32xf32>
    %c4 = arith.constant 4 : index
    %c0_21 = arith.constant 0 : index
    %56 = vector.load %arg4[%c4, %c0_21] : memref<12x32xf32, #tpu.memory_space<vmem>>, vector<1x32xf32>
    %c5 = arith.constant 5 : index
    %c0_22 = arith.constant 0 : index
    %57 = vector.load %arg4[%c5, %c0_22] : memref<12x32xf32, #tpu.memory_space<vmem>>, vector<1x32xf32>
    %cst_23 = arith.constant dense<0.000000e+00> : vector<32xf32>
    %58 = vector.multi_reduction <add>, %1, %cst_23 [1] : vector<32x32xf32> to vector<32xf32>
    %59 = vector.shape_cast %58 : vector<32xf32> to vector<32x1xf32>
    %cst_24 = arith.constant 3.200000e+01 : f32
    %60 = vector.broadcast %cst_24 : f32 to vector<32x1xf32>
    %61 = arith.divf %59, %60 : vector<32x1xf32>
    %62 = vector.broadcast %61 : vector<32x1xf32> to vector<32x32xf32>
    %63 = arith.subf %1, %62 : vector<32x32xf32>
    %64 = arith.mulf %63, %63 : vector<32x32xf32>
    %cst_25 = arith.constant dense<0.000000e+00> : vector<32xf32>
    %65 = vector.multi_reduction <add>, %64, %cst_25 [1] : vector<32x32xf32> to vector<32xf32>
    %66 = vector.shape_cast %65 : vector<32xf32> to vector<32x1xf32>
    %cst_26 = arith.constant 3.200000e+01 : f32
    %67 = vector.broadcast %cst_26 : f32 to vector<32x1xf32>
    %68 = arith.divf %66, %67 : vector<32x1xf32>
    %69 = vector.broadcast %61 : vector<32x1xf32> to vector<32x32xf32>
    %70 = arith.subf %1, %69 : vector<32x32xf32>
    %cst_27 = arith.constant 9.99999974E-6 : f32
    %71 = vector.broadcast %cst_27 : f32 to vector<32x1xf32>
    %72 = arith.addf %68, %71 : vector<32x1xf32>
    %73 = math.rsqrt %72 : vector<32x1xf32>
    %74 = vector.broadcast %73 : vector<32x1xf32> to vector<32x32xf32>
    %75 = arith.mulf %70, %74 : vector<32x32xf32>
    %76 = vector.broadcast %56 : vector<1x32xf32> to vector<32x32xf32>
    %77 = arith.mulf %75, %76 : vector<32x32xf32>
    %78 = vector.broadcast %57 : vector<1x32xf32> to vector<32x32xf32>
    %79 = arith.addf %77, %78 : vector<32x32xf32>
    %c0_28 = arith.constant 0 : index
    %c0_29 = arith.constant 0 : index
    %80 = vector.load %arg7[%c0_28, %c0_29] : memref<32x32xbf16, #tpu.memory_space<vmem>>, vector<32x32xbf16>
    %81 = arith.truncf %55 : vector<16x32xf32> to vector<16x32xbf16>
    %cst_30 = arith.constant dense<0.000000e+00> : vector<16x32xf32>
    %82 = tpu.matmul %81, %80, %cst_30 {dimension_numbers = #tpu.dot_dimension_numbers<[1], [0], [0], [1], [0, 0, 1, 1], [], []>} : vector<16x32xbf16>, vector<32x32xbf16>, vector<16x32xf32> -> vector<16x32xf32>
    %c7 = arith.constant 7 : index
    %c0_31 = arith.constant 0 : index
    %83 = vector.load %arg4[%c7, %c0_31] : memref<12x32xf32, #tpu.memory_space<vmem>>, vector<1x32xf32>
    %84 = vector.broadcast %83 : vector<1x32xf32> to vector<16x32xf32>
    %85 = arith.addf %82, %84 : vector<16x32xf32>
    %c0_32 = arith.constant 0 : index
    %c0_33 = arith.constant 0 : index
    %86 = vector.load %arg8[%c0_32, %c0_33] : memref<32x64xbf16, #tpu.memory_space<vmem>>, vector<32x64xbf16>
    %87 = arith.truncf %79 : vector<32x32xf32> to vector<32x32xbf16>
    %cst_34 = arith.constant dense<0.000000e+00> : vector<32x64xf32>
    %88 = tpu.matmul %87, %86, %cst_34 {dimension_numbers = #tpu.dot_dimension_numbers<[1], [0], [0], [1], [0, 0, 1, 1], [], []>} : vector<32x32xbf16>, vector<32x64xbf16>, vector<32x64xf32> -> vector<32x64xf32>
    %89 = vector.extract_strided_slice %88 {offsets = [0, 0], sizes = [32, 32], strides = [1, 1]} : vector<32x64xf32> to vector<32x32xf32>
    %c8 = arith.constant 8 : index
    %c0_35 = arith.constant 0 : index
    %90 = vector.load %arg4[%c8, %c0_35] : memref<12x32xf32, #tpu.memory_space<vmem>>, vector<1x32xf32>
    %91 = vector.broadcast %90 : vector<1x32xf32> to vector<32x32xf32>
    %92 = arith.addf %89, %91 : vector<32x32xf32>
    %93 = vector.extract_strided_slice %88 {offsets = [0, 32], sizes = [32, 32], strides = [1, 1]} : vector<32x64xf32> to vector<32x32xf32>
    %c9 = arith.constant 9 : index
    %c0_36 = arith.constant 0 : index
    %94 = vector.load %arg4[%c9, %c0_36] : memref<12x32xf32, #tpu.memory_space<vmem>>, vector<1x32xf32>
    %95 = vector.broadcast %94 : vector<1x32xf32> to vector<32x32xf32>
    %96 = arith.addf %93, %95 : vector<32x32xf32>
    %97 = vector.extract_strided_slice %85 {offsets = [0, 0], sizes = [8, 8], strides = [1, 1]} : vector<16x32xf32> to vector<8x8xf32>
    %98 = vector.extract_strided_slice %92 {offsets = [0, 0], sizes = [16, 8], strides = [1, 1]} : vector<32x32xf32> to vector<16x8xf32>
    %cst_37 = arith.constant dense<0.000000e+00> : vector<8x16xf32>
    %99 = tpu.matmul %97, %98, %cst_37 {dimension_numbers = #tpu.dot_dimension_numbers<[1], [1], [0], [0], [0, 0, 1, 0], [], []>} : vector<8x8xf32>, vector<16x8xf32>, vector<8x16xf32> -> vector<8x16xf32>
    %cst_38 = arith.constant 0.353553385 : f32
    %100 = vector.broadcast %cst_38 : f32 to vector<8x16xf32>
    %101 = arith.mulf %99, %100 : vector<8x16xf32>
    %cst_39 = arith.constant dense<0xFF800000> : vector<8xf32>
    %102 = vector.multi_reduction <maximumf>, %101, %cst_39 [1] : vector<8x16xf32> to vector<8xf32>
    %103 = vector.shape_cast %102 : vector<8xf32> to vector<8x1xf32>
    %104 = vector.broadcast %103 : vector<8x1xf32> to vector<8x16xf32>
    %105 = arith.subf %101, %104 : vector<8x16xf32>
    %106 = math.exp %105 : vector<8x16xf32>
    %cst_40 = arith.constant dense<0.000000e+00> : vector<8xf32>
    %107 = vector.multi_reduction <add>, %106, %cst_40 [1] : vector<8x16xf32> to vector<8xf32>
    %108 = vector.shape_cast %107 : vector<8xf32> to vector<8x1xf32>
    %109 = vector.broadcast %108 : vector<8x1xf32> to vector<8x16xf32>
    %110 = arith.divf %106, %109 : vector<8x16xf32>
    %111 = vector.extract_strided_slice %96 {offsets = [0, 0], sizes = [16, 8], strides = [1, 1]} : vector<32x32xf32> to vector<16x8xf32>
    %cst_41 = arith.constant dense<0.000000e+00> : vector<8x8xf32>
    %112 = tpu.matmul %110, %111, %cst_41 {dimension_numbers = #tpu.dot_dimension_numbers<[1], [0], [0], [1], [0, 0, 1, 1], [], []>} : vector<8x16xf32>, vector<16x8xf32>, vector<8x8xf32> -> vector<8x8xf32>
    %c0_42 = arith.constant 0 : index
    %c0_43 = arith.constant 0 : index
    %113 = vector.load %arg13[%c0_42, %c0_43] : memref<16x32xf32, #tpu.memory_space<vmem>>, vector<8x8xf32>
    tpu.vector_store %arg13[%c0_42, %c0_43], %112 {strides = array<i32>} : memref<16x32xf32, #tpu.memory_space<vmem>>, vector<8x8xf32>,
    %114 = vector.extract_strided_slice %85 {offsets = [0, 8], sizes = [8, 8], strides = [1, 1]} : vector<16x32xf32> to vector<8x8xf32>
    %115 = vector.extract_strided_slice %92 {offsets = [0, 8], sizes = [16, 8], strides = [1, 1]} : vector<32x32xf32> to vector<16x8xf32>
    %cst_44 = arith.constant dense<0.000000e+00> : vector<8x16xf32>
    %116 = tpu.matmul %114, %115, %cst_44 {dimension_numbers = #tpu.dot_dimension_numbers<[1], [1], [0], [0], [0, 0, 1, 0], [], []>} : vector<8x8xf32>, vector<16x8xf32>, vector<8x16xf32> -> vector<8x16xf32>
    %cst_45 = arith.constant 0.353553385 : f32
    %117 = vector.broadcast %cst_45 : f32 to vector<8x16xf32>
    %118 = arith.mulf %116, %117 : vector<8x16xf32>
    %cst_46 = arith.constant dense<0xFF800000> : vector<8xf32>
    %119 = vector.multi_reduction <maximumf>, %118, %cst_46 [1] : vector<8x16xf32> to vector<8xf32>
    %120 = vector.shape_cast %119 : vector<8xf32> to vector<8x1xf32>
    %121 = vector.broadcast %120 : vector<8x1xf32> to vector<8x16xf32>
    %122 = arith.subf %118, %121 : vector<8x16xf32>
    %123 = math.exp %122 : vector<8x16xf32>
    %cst_47 = arith.constant dense<0.000000e+00> : vector<8xf32>
    %124 = vector.multi_reduction <add>, %123, %cst_47 [1] : vector<8x16xf32> to vector<8xf32>
    %125 = vector.shape_cast %124 : vector<8xf32> to vector<8x1xf32>
    %126 = vector.broadcast %125 : vector<8x1xf32> to vector<8x16xf32>
    %127 = arith.divf %123, %126 : vector<8x16xf32>
    %128 = vector.extract_strided_slice %96 {offsets = [0, 8], sizes = [16, 8], strides = [1, 1]} : vector<32x32xf32> to vector<16x8xf32>
    %cst_48 = arith.constant dense<0.000000e+00> : vector<8x8xf32>
    %129 = tpu.matmul %127, %128, %cst_48 {dimension_numbers = #tpu.dot_dimension_numbers<[1], [0], [0], [1], [0, 0, 1, 1], [], []>} : vector<8x16xf32>, vector<16x8xf32>, vector<8x8xf32> -> vector<8x8xf32>
    %c0_49 = arith.constant 0 : index
    %c8_50 = arith.constant 8 : index
    %130 = vector.load %arg13[%c0_49, %c8_50] : memref<16x32xf32, #tpu.memory_space<vmem>>, vector<8x8xf32>
    tpu.vector_store %arg13[%c0_49, %c8_50], %129 {strides = array<i32>} : memref<16x32xf32, #tpu.memory_space<vmem>>, vector<8x8xf32>,
    %131 = vector.extract_strided_slice %85 {offsets = [0, 16], sizes = [8, 8], strides = [1, 1]} : vector<16x32xf32> to vector<8x8xf32>
    %132 = vector.extract_strided_slice %92 {offsets = [0, 16], sizes = [16, 8], strides = [1, 1]} : vector<32x32xf32> to vector<16x8xf32>
    %cst_51 = arith.constant dense<0.000000e+00> : vector<8x16xf32>
    %133 = tpu.matmul %131, %132, %cst_51 {dimension_numbers = #tpu.dot_dimension_numbers<[1], [1], [0], [0], [0, 0, 1, 0], [], []>} : vector<8x8xf32>, vector<16x8xf32>, vector<8x16xf32> -> vector<8x16xf32>
    %cst_52 = arith.constant 0.353553385 : f32
    %134 = vector.broadcast %cst_52 : f32 to vector<8x16xf32>
    %135 = arith.mulf %133, %134 : vector<8x16xf32>
    %cst_53 = arith.constant dense<0xFF800000> : vector<8xf32>
    %136 = vector.multi_reduction <maximumf>, %135, %cst_53 [1] : vector<8x16xf32> to vector<8xf32>
    %137 = vector.shape_cast %136 : vector<8xf32> to vector<8x1xf32>
    %138 = vector.broadcast %137 : vector<8x1xf32> to vector<8x16xf32>
    %139 = arith.subf %135, %138 : vector<8x16xf32>
    %140 = math.exp %139 : vector<8x16xf32>
    %cst_54 = arith.constant dense<0.000000e+00> : vector<8xf32>
    %141 = vector.multi_reduction <add>, %140, %cst_54 [1] : vector<8x16xf32> to vector<8xf32>
    %142 = vector.shape_cast %141 : vector<8xf32> to vector<8x1xf32>
    %143 = vector.broadcast %142 : vector<8x1xf32> to vector<8x16xf32>
    %144 = arith.divf %140, %143 : vector<8x16xf32>
    %145 = vector.extract_strided_slice %96 {offsets = [0, 16], sizes = [16, 8], strides = [1, 1]} : vector<32x32xf32> to vector<16x8xf32>
    %cst_55 = arith.constant dense<0.000000e+00> : vector<8x8xf32>
    %146 = tpu.matmul %144, %145, %cst_55 {dimension_numbers = #tpu.dot_dimension_numbers<[1], [0], [0], [1], [0, 0, 1, 1], [], []>} : vector<8x16xf32>, vector<16x8xf32>, vector<8x8xf32> -> vector<8x8xf32>
    %c0_56 = arith.constant 0 : index
    %c16 = arith.constant 16 : index
    %147 = vector.load %arg13[%c0_56, %c16] : memref<16x32xf32, #tpu.memory_space<vmem>>, vector<8x8xf32>
    tpu.vector_store %arg13[%c0_56, %c16], %146 {strides = array<i32>} : memref<16x32xf32, #tpu.memory_space<vmem>>, vector<8x8xf32>,
    %148 = vector.extract_strided_slice %85 {offsets = [0, 24], sizes = [8, 8], strides = [1, 1]} : vector<16x32xf32> to vector<8x8xf32>
    %149 = vector.extract_strided_slice %92 {offsets = [0, 24], sizes = [16, 8], strides = [1, 1]} : vector<32x32xf32> to vector<16x8xf32>
    %cst_57 = arith.constant dense<0.000000e+00> : vector<8x16xf32>
    %150 = tpu.matmul %148, %149, %cst_57 {dimension_numbers = #tpu.dot_dimension_numbers<[1], [1], [0], [0], [0, 0, 1, 0], [], []>} : vector<8x8xf32>, vector<16x8xf32>, vector<8x16xf32> -> vector<8x16xf32>
    %cst_58 = arith.constant 0.353553385 : f32
    %151 = vector.broadcast %cst_58 : f32 to vector<8x16xf32>
    %152 = arith.mulf %150, %151 : vector<8x16xf32>
    %cst_59 = arith.constant dense<0xFF800000> : vector<8xf32>
    %153 = vector.multi_reduction <maximumf>, %152, %cst_59 [1] : vector<8x16xf32> to vector<8xf32>
    %154 = vector.shape_cast %153 : vector<8xf32> to vector<8x1xf32>
    %155 = vector.broadcast %154 : vector<8x1xf32> to vector<8x16xf32>
    %156 = arith.subf %152, %155 : vector<8x16xf32>
    %157 = math.exp %156 : vector<8x16xf32>
    %cst_60 = arith.constant dense<0.000000e+00> : vector<8xf32>
    %158 = vector.multi_reduction <add>, %157, %cst_60 [1] : vector<8x16xf32> to vector<8xf32>
    %159 = vector.shape_cast %158 : vector<8xf32> to vector<8x1xf32>
    %160 = vector.broadcast %159 : vector<8x1xf32> to vector<8x16xf32>
    %161 = arith.divf %157, %160 : vector<8x16xf32>
    %162 = vector.extract_strided_slice %96 {offsets = [0, 24], sizes = [16, 8], strides = [1, 1]} : vector<32x32xf32> to vector<16x8xf32>
    %cst_61 = arith.constant dense<0.000000e+00> : vector<8x8xf32>
    %163 = tpu.matmul %161, %162, %cst_61 {dimension_numbers = #tpu.dot_dimension_numbers<[1], [0], [0], [1], [0, 0, 1, 1], [], []>} : vector<8x16xf32>, vector<16x8xf32>, vector<8x8xf32> -> vector<8x8xf32>
    %c0_62 = arith.constant 0 : index
    %c24 = arith.constant 24 : index
    %164 = vector.load %arg13[%c0_62, %c24] : memref<16x32xf32, #tpu.memory_space<vmem>>, vector<8x8xf32>
    tpu.vector_store %arg13[%c0_62, %c24], %163 {strides = array<i32>} : memref<16x32xf32, #tpu.memory_space<vmem>>, vector<8x8xf32>,
    %165 = vector.extract_strided_slice %85 {offsets = [8, 0], sizes = [8, 8], strides = [1, 1]} : vector<16x32xf32> to vector<8x8xf32>
    %166 = vector.extract_strided_slice %92 {offsets = [16, 0], sizes = [16, 8], strides = [1, 1]} : vector<32x32xf32> to vector<16x8xf32>
    %cst_63 = arith.constant dense<0.000000e+00> : vector<8x16xf32>
    %167 = tpu.matmul %165, %166, %cst_63 {dimension_numbers = #tpu.dot_dimension_numbers<[1], [1], [0], [0], [0, 0, 1, 0], [], []>} : vector<8x8xf32>, vector<16x8xf32>, vector<8x16xf32> -> vector<8x16xf32>
    %cst_64 = arith.constant 0.353553385 : f32
    %168 = vector.broadcast %cst_64 : f32 to vector<8x16xf32>
    %169 = arith.mulf %167, %168 : vector<8x16xf32>
    %cst_65 = arith.constant dense<0xFF800000> : vector<8xf32>
    %170 = vector.multi_reduction <maximumf>, %169, %cst_65 [1] : vector<8x16xf32> to vector<8xf32>
    %171 = vector.shape_cast %170 : vector<8xf32> to vector<8x1xf32>
    %172 = vector.broadcast %171 : vector<8x1xf32> to vector<8x16xf32>
    %173 = arith.subf %169, %172 : vector<8x16xf32>
    %174 = math.exp %173 : vector<8x16xf32>
    %cst_66 = arith.constant dense<0.000000e+00> : vector<8xf32>
    %175 = vector.multi_reduction <add>, %174, %cst_66 [1] : vector<8x16xf32> to vector<8xf32>
    %176 = vector.shape_cast %175 : vector<8xf32> to vector<8x1xf32>
    %177 = vector.broadcast %176 : vector<8x1xf32> to vector<8x16xf32>
    %178 = arith.divf %174, %177 : vector<8x16xf32>
    %179 = vector.extract_strided_slice %96 {offsets = [16, 0], sizes = [16, 8], strides = [1, 1]} : vector<32x32xf32> to vector<16x8xf32>
    %cst_67 = arith.constant dense<0.000000e+00> : vector<8x8xf32>
    %180 = tpu.matmul %178, %179, %cst_67 {dimension_numbers = #tpu.dot_dimension_numbers<[1], [0], [0], [1], [0, 0, 1, 1], [], []>} : vector<8x16xf32>, vector<16x8xf32>, vector<8x8xf32> -> vector<8x8xf32>
    %c8_68 = arith.constant 8 : index
    %c0_69 = arith.constant 0 : index
    %181 = vector.load %arg13[%c8_68, %c0_69] : memref<16x32xf32, #tpu.memory_space<vmem>>, vector<8x8xf32>
    tpu.vector_store %arg13[%c8_68, %c0_69], %180 {strides = array<i32>} : memref<16x32xf32, #tpu.memory_space<vmem>>, vector<8x8xf32>,
    %182 = vector.extract_strided_slice %85 {offsets = [8, 8], sizes = [8, 8], strides = [1, 1]} : vector<16x32xf32> to vector<8x8xf32>
    %183 = vector.extract_strided_slice %92 {offsets = [16, 8], sizes = [16, 8], strides = [1, 1]} : vector<32x32xf32> to vector<16x8xf32>
    %cst_70 = arith.constant dense<0.000000e+00> : vector<8x16xf32>
    %184 = tpu.matmul %182, %183, %cst_70 {dimension_numbers = #tpu.dot_dimension_numbers<[1], [1], [0], [0], [0, 0, 1, 0], [], []>} : vector<8x8xf32>, vector<16x8xf32>, vector<8x16xf32> -> vector<8x16xf32>
    %cst_71 = arith.constant 0.353553385 : f32
    %185 = vector.broadcast %cst_71 : f32 to vector<8x16xf32>
    %186 = arith.mulf %184, %185 : vector<8x16xf32>
    %cst_72 = arith.constant dense<0xFF800000> : vector<8xf32>
    %187 = vector.multi_reduction <maximumf>, %186, %cst_72 [1] : vector<8x16xf32> to vector<8xf32>
    %188 = vector.shape_cast %187 : vector<8xf32> to vector<8x1xf32>
    %189 = vector.broadcast %188 : vector<8x1xf32> to vector<8x16xf32>
    %190 = arith.subf %186, %189 : vector<8x16xf32>
    %191 = math.exp %190 : vector<8x16xf32>
    %cst_73 = arith.constant dense<0.000000e+00> : vector<8xf32>
    %192 = vector.multi_reduction <add>, %191, %cst_73 [1] : vector<8x16xf32> to vector<8xf32>
    %193 = vector.shape_cast %192 : vector<8xf32> to vector<8x1xf32>
    %194 = vector.broadcast %193 : vector<8x1xf32> to vector<8x16xf32>
    %195 = arith.divf %191, %194 : vector<8x16xf32>
    %196 = vector.extract_strided_slice %96 {offsets = [16, 8], sizes = [16, 8], strides = [1, 1]} : vector<32x32xf32> to vector<16x8xf32>
    %cst_74 = arith.constant dense<0.000000e+00> : vector<8x8xf32>
    %197 = tpu.matmul %195, %196, %cst_74 {dimension_numbers = #tpu.dot_dimension_numbers<[1], [0], [0], [1], [0, 0, 1, 1], [], []>} : vector<8x16xf32>, vector<16x8xf32>, vector<8x8xf32> -> vector<8x8xf32>
    %c8_75 = arith.constant 8 : index
    %c8_76 = arith.constant 8 : index
    %198 = vector.load %arg13[%c8_75, %c8_76] : memref<16x32xf32, #tpu.memory_space<vmem>>, vector<8x8xf32>
    tpu.vector_store %arg13[%c8_75, %c8_76], %197 {strides = array<i32>} : memref<16x32xf32, #tpu.memory_space<vmem>>, vector<8x8xf32>,
    %199 = vector.extract_strided_slice %85 {offsets = [8, 16], sizes = [8, 8], strides = [1, 1]} : vector<16x32xf32> to vector<8x8xf32>
    %200 = vector.extract_strided_slice %92 {offsets = [16, 16], sizes = [16, 8], strides = [1, 1]} : vector<32x32xf32> to vector<16x8xf32>
    %cst_77 = arith.constant dense<0.000000e+00> : vector<8x16xf32>
    %201 = tpu.matmul %199, %200, %cst_77 {dimension_numbers = #tpu.dot_dimension_numbers<[1], [1], [0], [0], [0, 0, 1, 0], [], []>} : vector<8x8xf32>, vector<16x8xf32>, vector<8x16xf32> -> vector<8x16xf32>
    %cst_78 = arith.constant 0.353553385 : f32
    %202 = vector.broadcast %cst_78 : f32 to vector<8x16xf32>
    %203 = arith.mulf %201, %202 : vector<8x16xf32>
    %cst_79 = arith.constant dense<0xFF800000> : vector<8xf32>
    %204 = vector.multi_reduction <maximumf>, %203, %cst_79 [1] : vector<8x16xf32> to vector<8xf32>
    %205 = vector.shape_cast %204 : vector<8xf32> to vector<8x1xf32>
    %206 = vector.broadcast %205 : vector<8x1xf32> to vector<8x16xf32>
    %207 = arith.subf %203, %206 : vector<8x16xf32>
    %208 = math.exp %207 : vector<8x16xf32>
    %cst_80 = arith.constant dense<0.000000e+00> : vector<8xf32>
    %209 = vector.multi_reduction <add>, %208, %cst_80 [1] : vector<8x16xf32> to vector<8xf32>
    %210 = vector.shape_cast %209 : vector<8xf32> to vector<8x1xf32>
    %211 = vector.broadcast %210 : vector<8x1xf32> to vector<8x16xf32>
    %212 = arith.divf %208, %211 : vector<8x16xf32>
    %213 = vector.extract_strided_slice %96 {offsets = [16, 16], sizes = [16, 8], strides = [1, 1]} : vector<32x32xf32> to vector<16x8xf32>
    %cst_81 = arith.constant dense<0.000000e+00> : vector<8x8xf32>
    %214 = tpu.matmul %212, %213, %cst_81 {dimension_numbers = #tpu.dot_dimension_numbers<[1], [0], [0], [1], [0, 0, 1, 1], [], []>} : vector<8x16xf32>, vector<16x8xf32>, vector<8x8xf32> -> vector<8x8xf32>
    %c8_82 = arith.constant 8 : index
    %c16_83 = arith.constant 16 : index
    %215 = vector.load %arg13[%c8_82, %c16_83] : memref<16x32xf32, #tpu.memory_space<vmem>>, vector<8x8xf32>
    tpu.vector_store %arg13[%c8_82, %c16_83], %214 {strides = array<i32>} : memref<16x32xf32, #tpu.memory_space<vmem>>, vector<8x8xf32>,
    %216 = vector.extract_strided_slice %85 {offsets = [8, 24], sizes = [8, 8], strides = [1, 1]} : vector<16x32xf32> to vector<8x8xf32>
    %217 = vector.extract_strided_slice %92 {offsets = [16, 24], sizes = [16, 8], strides = [1, 1]} : vector<32x32xf32> to vector<16x8xf32>
    %cst_84 = arith.constant dense<0.000000e+00> : vector<8x16xf32>
    %218 = tpu.matmul %216, %217, %cst_84 {dimension_numbers = #tpu.dot_dimension_numbers<[1], [1], [0], [0], [0, 0, 1, 0], [], []>} : vector<8x8xf32>, vector<16x8xf32>, vector<8x16xf32> -> vector<8x16xf32>
    %cst_85 = arith.constant 0.353553385 : f32
    %219 = vector.broadcast %cst_85 : f32 to vector<8x16xf32>
    %220 = arith.mulf %218, %219 : vector<8x16xf32>
    %cst_86 = arith.constant dense<0xFF800000> : vector<8xf32>
    %221 = vector.multi_reduction <maximumf>, %220, %cst_86 [1] : vector<8x16xf32> to vector<8xf32>
    %222 = vector.shape_cast %221 : vector<8xf32> to vector<8x1xf32>
    %223 = vector.broadcast %222 : vector<8x1xf32> to vector<8x16xf32>
    %224 = arith.subf %220, %223 : vector<8x16xf32>
    %225 = math.exp %224 : vector<8x16xf32>
    %cst_87 = arith.constant dense<0.000000e+00> : vector<8xf32>
    %226 = vector.multi_reduction <add>, %225, %cst_87 [1] : vector<8x16xf32> to vector<8xf32>
    %227 = vector.shape_cast %226 : vector<8xf32> to vector<8x1xf32>
    %228 = vector.broadcast %227 : vector<8x1xf32> to vector<8x16xf32>
    %229 = arith.divf %225, %228 : vector<8x16xf32>
    %230 = vector.extract_strided_slice %96 {offsets = [16, 24], sizes = [16, 8], strides = [1, 1]} : vector<32x32xf32> to vector<16x8xf32>
    %cst_88 = arith.constant dense<0.000000e+00> : vector<8x8xf32>
    %231 = tpu.matmul %229, %230, %cst_88 {dimension_numbers = #tpu.dot_dimension_numbers<[1], [0], [0], [1], [0, 0, 1, 1], [], []>} : vector<8x16xf32>, vector<16x8xf32>, vector<8x8xf32> -> vector<8x8xf32>
    %c8_89 = arith.constant 8 : index
    %c24_90 = arith.constant 24 : index
    %232 = vector.load %arg13[%c8_89, %c24_90] : memref<16x32xf32, #tpu.memory_space<vmem>>, vector<8x8xf32>
    tpu.vector_store %arg13[%c8_89, %c24_90], %231 {strides = array<i32>} : memref<16x32xf32, #tpu.memory_space<vmem>>, vector<8x8xf32>,
    %c0_91 = arith.constant 0 : index
    %c0_92 = arith.constant 0 : index
    %233 = vector.load %arg13[%c0_91, %c0_92] : memref<16x32xf32, #tpu.memory_space<vmem>>, vector<16x32xf32>
    %c0_93 = arith.constant 0 : index
    %c0_94 = arith.constant 0 : index
    %234 = vector.load %arg9[%c0_93, %c0_94] : memref<32x32xbf16, #tpu.memory_space<vmem>>, vector<32x32xbf16>
    %235 = arith.truncf %233 : vector<16x32xf32> to vector<16x32xbf16>
    %cst_95 = arith.constant dense<0.000000e+00> : vector<16x32xf32>
    %236 = tpu.matmul %235, %234, %cst_95 {dimension_numbers = #tpu.dot_dimension_numbers<[1], [0], [0], [1], [0, 0, 1, 1], [], []>} : vector<16x32xbf16>, vector<32x32xbf16>, vector<16x32xf32> -> vector<16x32xf32>
    %237 = arith.addf %31, %236 : vector<16x32xf32>
    %c10 = arith.constant 10 : index
    %c0_96 = arith.constant 0 : index
    %238 = vector.load %arg4[%c10, %c0_96] : memref<12x32xf32, #tpu.memory_space<vmem>>, vector<1x32xf32>
    %239 = vector.broadcast %238 : vector<1x32xf32> to vector<16x32xf32>
    %240 = arith.addf %237, %239 : vector<16x32xf32>
    %c0_97 = arith.constant 0 : index
    %c0_98 = arith.constant 0 : index
    %241 = vector.load %arg4[%c0_97, %c0_98] : memref<12x32xf32, #tpu.memory_space<vmem>>, vector<1x32xf32>
    %c1_99 = arith.constant 1 : index
    %c0_100 = arith.constant 0 : index
    %242 = vector.load %arg4[%c1_99, %c0_100] : memref<12x32xf32, #tpu.memory_space<vmem>>, vector<1x32xf32>
    %cst_101 = arith.constant dense<0.000000e+00> : vector<16xf32>
    %243 = vector.multi_reduction <add>, %240, %cst_101 [1] : vector<16x32xf32> to vector<16xf32>
    %244 = vector.shape_cast %243 : vector<16xf32> to vector<16x1xf32>
    %cst_102 = arith.constant 3.200000e+01 : f32
    %245 = vector.broadcast %cst_102 : f32 to vector<16x1xf32>
    %246 = arith.divf %244, %245 : vector<16x1xf32>
    %247 = vector.broadcast %246 : vector<16x1xf32> to vector<16x32xf32>
    %248 = arith.subf %240, %247 : vector<16x32xf32>
    %249 = arith.mulf %248, %248 : vector<16x32xf32>
    %cst_103 = arith.constant dense<0.000000e+00> : vector<16xf32>
    %250 = vector.multi_reduction <add>, %249, %cst_103 [1] : vector<16x32xf32> to vector<16xf32>
    %251 = vector.shape_cast %250 : vector<16xf32> to vector<16x1xf32>
    %cst_104 = arith.constant 3.200000e+01 : f32
    %252 = vector.broadcast %cst_104 : f32 to vector<16x1xf32>
    %253 = arith.divf %251, %252 : vector<16x1xf32>
    %254 = vector.broadcast %246 : vector<16x1xf32> to vector<16x32xf32>
    %255 = arith.subf %240, %254 : vector<16x32xf32>
    %cst_105 = arith.constant 9.99999974E-6 : f32
    %256 = vector.broadcast %cst_105 : f32 to vector<16x1xf32>
    %257 = arith.addf %253, %256 : vector<16x1xf32>
    %258 = math.rsqrt %257 : vector<16x1xf32>
    %259 = vector.broadcast %258 : vector<16x1xf32> to vector<16x32xf32>
    %260 = arith.mulf %255, %259 : vector<16x32xf32>
    %261 = vector.broadcast %241 : vector<1x32xf32> to vector<16x32xf32>
    %262 = arith.mulf %260, %261 : vector<16x32xf32>
    %263 = vector.broadcast %242 : vector<1x32xf32> to vector<16x32xf32>
    %264 = arith.addf %262, %263 : vector<16x32xf32>
    %c0_106 = arith.constant 0 : index
    %c0_107 = arith.constant 0 : index
    %265 = vector.load %arg10[%c0_106, %c0_107] : memref<32x128xbf16, #tpu.memory_space<vmem>>, vector<32x128xbf16>
    %266 = arith.truncf %264 : vector<16x32xf32> to vector<16x32xbf16>
    %cst_108 = arith.constant dense<0.000000e+00> : vector<16x128xf32>
    %267 = tpu.matmul %266, %265, %cst_108 {dimension_numbers = #tpu.dot_dimension_numbers<[1], [0], [0], [1], [0, 0, 1, 1], [], []>} : vector<16x32xbf16>, vector<32x128xbf16>, vector<16x128xf32> -> vector<16x128xf32>
    %c0_109 = arith.constant 0 : index
    %c0_110 = arith.constant 0 : index
    %268 = vector.load %arg5[%c0_109, %c0_110] : memref<1x128xf32, #tpu.memory_space<vmem>>, vector<1x128xf32>
    %269 = vector.broadcast %268 : vector<1x128xf32> to vector<16x128xf32>
    %270 = arith.addf %267, %269 : vector<16x128xf32>
    %cst_111 = arith.constant 1.702000e+00 : f32
    %271 = vector.broadcast %cst_111 : f32 to vector<16x128xf32>
    %272 = arith.mulf %271, %270 : vector<16x128xf32>
    %273 = arith.negf %272 : vector<16x128xf32>
    %274 = math.exp %273 : vector<16x128xf32>
    %cst_112 = arith.constant 1.000000e+00 : f32
    %275 = vector.broadcast %cst_112 : f32 to vector<16x128xf32>
    %276 = arith.addf %275, %274 : vector<16x128xf32>
    %277 = arith.divf %275, %276 : vector<16x128xf32>
    %278 = arith.mulf %270, %277 : vector<16x128xf32>
    %c0_113 = arith.constant 0 : index
    %c0_114 = arith.constant 0 : index
    %279 = vector.load %arg11[%c0_113, %c0_114] : memref<128x32xbf16, #tpu.memory_space<vmem>>, vector<128x32xbf16>
    %280 = arith.truncf %278 : vector<16x128xf32> to vector<16x128xbf16>
    %cst_115 = arith.constant dense<0.000000e+00> : vector<16x32xf32>
    %281 = tpu.matmul %280, %279, %cst_115 {dimension_numbers = #tpu.dot_dimension_numbers<[1], [0], [0], [1], [0, 0, 1, 1], [], []>} : vector<16x128xbf16>, vector<128x32xbf16>, vector<16x32xf32> -> vector<16x32xf32>
    %282 = arith.addf %240, %281 : vector<16x32xf32>
    %c11 = arith.constant 11 : index
    %c0_116 = arith.constant 0 : index
    %283 = vector.load %arg4[%c11, %c0_116] : memref<12x32xf32, #tpu.memory_space<vmem>>, vector<1x32xf32>
    %284 = vector.broadcast %283 : vector<1x32xf32> to vector<16x32xf32>
    %285 = arith.addf %282, %284 : vector<16x32xf32>
    %c0_117 = arith.constant 0 : index
    %c0_118 = arith.constant 0 : index
    %286 = vector.load %arg12[%c0_117, %c0_118] : memref<16x32xf32, #tpu.memory_space<vmem>>, vector<16x32xf32>
    tpu.vector_store %arg12[%c0_117, %c0_118], %285 {strides = array<i32>} : memref<16x32xf32, #tpu.memory_space<vmem>>, vector<16x32xf32>,
    return
  }
  func.func @transform_0(%arg0: i32) -> (i32, i32) {
    %c0_i32 = arith.constant 0 : i32
    %c0_i32_0 = arith.constant 0 : i32
    return %arg0, %c0_i32 : i32, i32
  }
  func.func @transform_1(%arg0: i32) -> (i32, i32) {
    %c0_i32 = arith.constant 0 : i32
    %c0_i32_0 = arith.constant 0 : i32
    return %arg0, %c0_i32 : i32, i32
  }
  func.func @transform_2(%arg0: i32) -> (i32, i32) {
    %c0_i32 = arith.constant 0 : i32
    %c0_i32_0 = arith.constant 0 : i32
    %c0_i32_1 = arith.constant 0 : i32
    return %c0_i32, %c0_i32_0 : i32, i32
  }
  func.func @transform_3(%arg0: i32) -> (i32, i32) {
    %c0_i32 = arith.constant 0 : i32
    %c0_i32_0 = arith.constant 0 : i32
    %c0_i32_1 = arith.constant 0 : i32
    return %c0_i32, %c0_i32_0 : i32, i32
  }
  func.func @transform_4(%arg0: i32) -> (i32, i32) {
    %c0_i32 = arith.constant 0 : i32
    %c0_i32_0 = arith.constant 0 : i32
    %c0_i32_1 = arith.constant 0 : i32
    return %c0_i32, %c0_i32_0 : i32, i32
  }
  func.func @transform_5(%arg0: i32) -> (i32, i32) {
    %c0_i32 = arith.constant 0 : i32
    %c0_i32_0 = arith.constant 0 : i32
    %c0_i32_1 = arith.constant 0 : i32
    return %c0_i32, %c0_i32_0 : i32, i32
  }
  func.func @transform_6(%arg0: i32) -> (i32, i32) {
    %c0_i32 = arith.constant 0 : i32
    %c0_i32_0 = arith.constant 0 : i32
    %c0_i32_1 = arith.constant 0 : i32
    return %c0_i32, %c0_i32_0 : i32, i32
  }
  func.func @transform_7(%arg0: i32) -> (i32, i32) {
    %c0_i32 = arith.constant 0 : i32
    %c0_i32_0 = arith.constant 0 : i32
    %c0_i32_1 = arith.constant 0 : i32
    return %c0_i32, %c0_i32_0 : i32, i32
  }
  func.func @transform_8(%arg0: i32) -> (i32, i32) {
    %c0_i32 = arith.constant 0 : i32
    %c0_i32_0 = arith.constant 0 : i32
    %c0_i32_1 = arith.constant 0 : i32
    return %c0_i32, %c0_i32_0 : i32, i32
  }
  func.func @transform_9(%arg0: i32) -> (i32, i32) {
    %c0_i32 = arith.constant 0 : i32
    %c0_i32_0 = arith.constant 0 : i32
    %c0_i32_1 = arith.constant 0 : i32
    return %c0_i32, %c0_i32_0 : i32, i32
  }
  func.func @transform_10(%arg0: i32) -> (i32, i32) {
    %c0_i32 = arith.constant 0 : i32
    %c0_i32_0 = arith.constant 0 : i32
    %c0_i32_1 = arith.constant 0 : i32
    return %c0_i32, %c0_i32_0 : i32, i32
  }
  func.func @transform_11(%arg0: i32) -> (i32, i32) {
    %c0_i32 = arith.constant 0 : i32
    %c0_i32_0 = arith.constant 0 : i32
    return %arg0, %c0_i32 : i32, i32
  }
}

</mosaic_0001>

<llo_original>
// kernel: extractor_forward.1
$region0: #{extractor_forward.1}
  #allocation0 [shape = 'u32[]', space=smem, size = 0x4, offset = 0x4, fixed_abs, tag = 'smem constant byte address 0x4 - core index']
  #allocation1 [shape = 'u32[144,128]{1,0:T(1,128)}', space=vmem, size = 0x12000, scoped, tag = 'internal scratch']
  #allocation2 [shape = 'f32[16,32]{1,0:T(8,128)}', space=vmem, size = 0x2000, scoped, tag = 'scratch operand']
  %s0 = inlined_call_operand.vmem [shape: f32[16,48], index: 0, kind: input, shape index: {}]
  %s1 = inlined_call_operand.vmem [shape: f32[32,32], index: 1, kind: input, shape index: {}]
  %s2 = inlined_call_operand.vmem [shape: f32[2,48], index: 2, kind: input, shape index: {}]
  %s3 = inlined_call_operand.vmem [shape: f32[12,32], index: 3, kind: input, shape index: {}]
  %s4 = inlined_call_operand.vmem [shape: f32[1,128], index: 4, kind: input, shape index: {}]
  %s5 = inlined_call_operand.vmem [shape: bf16[48,32], index: 5, kind: input, shape index: {}]
  %s6 = inlined_call_operand.vmem [shape: bf16[32,32], index: 6, kind: input, shape index: {}]
  %s7 = inlined_call_operand.vmem [shape: bf16[32,64], index: 7, kind: input, shape index: {}]
  %s8 = inlined_call_operand.vmem [shape: bf16[32,32], index: 8, kind: input, shape index: {}]
  %s9 = inlined_call_operand.vmem [shape: bf16[32,128], index: 9, kind: input, shape index: {}]
  %s10 = inlined_call_operand.vmem [shape: bf16[128,32], index: 10, kind: input, shape index: {}]
  %s11 = inlined_call_operand.vmem [shape: f32[16,32], index: 11, kind: output, shape index: {}]
  %s12 = sld [smem:[#allocation0]]
  $region54: #{extractor_forward.1} parent=0
    _
  %s14 = ssub.s32 1, %s12
  %s15 = scalar_select 0, %s14, %s12
  // Predicated region
  $region2: #{extractor_forward.1} parent=0 // pred_check
    _
  $region3: #{extractor_forward.1} parent=0 // pred_check_branch
    %17 = sbr.rel (0) target = $region5
  $region4: #{extractor_forward.1} parent=0 // pred_region
    _
  $region5: #{extractor_forward.1} parent=0 // pred_fallthru
    _
  // Predicated region
  $region6: #{extractor_forward.1} parent=0 // pred_check
    _
  $region7: #{extractor_forward.1} parent=0 // pred_check_branch
    %19 = sbr.rel (0) target = $region9
  $region8: #{extractor_forward.1} parent=0 // pred_region
    _
  $region9: #{extractor_forward.1} parent=0 // pred_fallthru
    _
  // Predicated region
  $region10: #{extractor_forward.1} parent=0 // pred_check
    _
  $region11: #{extractor_forward.1} parent=0 // pred_check_branch
    %21 = sbr.rel (0) target = $region13
  $region12: #{extractor_forward.1} parent=0 // pred_region
    _
  $region13: #{extractor_forward.1} parent=0 // pred_fallthru
    _
  // Predicated region
  $region14: #{extractor_forward.1} parent=0 // pred_check
    _
  $region15: #{extractor_forward.1} parent=0 // pred_check_branch
    %23 = sbr.rel (0) target = $region17
  $region16: #{extractor_forward.1} parent=0 // pred_region
    _
  $region17: #{extractor_forward.1} parent=0 // pred_fallthru
    _
  // Predicated region
  $region18: #{extractor_forward.1} parent=0 // pred_check
    _
  $region19: #{extractor_forward.1} parent=0 // pred_check_branch
    %25 = sbr.rel (0) target = $region21
  $region20: #{extractor_forward.1} parent=0 // pred_region
    _
  $region21: #{extractor_forward.1} parent=0 // pred_fallthru
    _
  // Predicated region
  $region22: #{extractor_forward.1} parent=0 // pred_check
    _
  $region23: #{extractor_forward.1} parent=0 // pred_check_branch
    %27 = sbr.rel (0) target = $region25
  $region24: #{extractor_forward.1} parent=0 // pred_region
    _
  $region25: #{extractor_forward.1} parent=0 // pred_fallthru
    _
  // Predicated region
  $region26: #{extractor_forward.1} parent=0 // pred_check
    _
  $region27: #{extractor_forward.1} parent=0 // pred_check_branch
    %29 = sbr.rel (0) target = $region29
  $region28: #{extractor_forward.1} parent=0 // pred_region
    _
  $region29: #{extractor_forward.1} parent=0 // pred_fallthru
    _
  // Predicated region
  $region30: #{extractor_forward.1} parent=0 // pred_check
    _
  $region31: #{extractor_forward.1} parent=0 // pred_check_branch
    %31 = sbr.rel (0) target = $region33
  $region32: #{extractor_forward.1} parent=0 // pred_region
    _
  $region33: #{extractor_forward.1} parent=0 // pred_fallthru
    _
  // Predicated region
  $region34: #{extractor_forward.1} parent=0 // pred_check
    _
  $region35: #{extractor_forward.1} parent=0 // pred_check_branch
    %33 = sbr.rel (0) target = $region37
  $region36: #{extractor_forward.1} parent=0 // pred_region
    _
  $region37: #{extractor_forward.1} parent=0 // pred_fallthru
    _
  // Predicated region
  $region38: #{extractor_forward.1} parent=0 // pred_check
    _
  $region39: #{extractor_forward.1} parent=0 // pred_check_branch
    %35 = sbr.rel (0) target = $region41
  $region40: #{extractor_forward.1} parent=0 // pred_region
    _
  $region41: #{extractor_forward.1} parent=0 // pred_fallthru
    _
  // Predicated region
  $region42: #{extractor_forward.1} parent=0 // pred_check
    _
  $region43: #{extractor_forward.1} parent=0 // pred_check_branch
    %37 = sbr.rel (0) target = $region45
  $region44: #{extractor_forward.1} parent=0 // pred_region
    _
  $region45: #{extractor_forward.1} parent=0 // pred_fallthru
    _
  %v39 = vld [vmem:[%s0] sm:$0xff]
  %v40 = vld [vmem:[%s0 + $0x8] sm:$0xff]
  %v41 = vld [vmem:[%s1] sm:$0xff]
  %v42 = vld [vmem:[%s1 + $0x8] sm:$0xff]
  %v43 = vld [vmem:[%s1 + $0x10] sm:$0xff]
  %v44 = vld [vmem:[%s1 + $0x18] sm:$0xff]
  %v45 = vld [vmem:[%s2] sm:$0x1]
  %v46 = vld [vmem:[%s2 + $0x1] sm:$0x1]
  %vm47 = vcmask 392192
  %v48 = vsel %vm47, %v39, 0.0
  %49 = vadd.xlane.f32.xlu0 %v48
  %v50 = vpop.xlane.xlu0 %49
  %v51 = vsel %vm47, %v40, 0.0
  %52 = vadd.xlane.f32.xlu0 %v51
  %v53 = vpop.xlane.xlu0 %52
  %v54 = vrcp.pop 48.0
  %v55 = vmul.f32 %v50, %v54
  %v56 = vmul.f32 %v53, %v54
  %v57 = vsub.f32 %v39, %v55
  %v58 = vsub.f32 %v40, %v56
  %v59 = vmul.f32 %v57, %v57
  %v60 = vmul.f32 %v58, %v58
  %v61 = vsel %vm47, %v59, 0.0
  %62 = vadd.xlane.f32.xlu0 %v61
  %v63 = vpop.xlane.xlu0 %62
  %v64 = vsel %vm47, %v60, 0.0
  %65 = vadd.xlane.f32.xlu0 %v64
  %v66 = vpop.xlane.xlu0 %65
  %v67 = vmul.f32 %v63, %v54
  %v68 = vmul.f32 %v66, %v54
  %v69 = vadd.f32 %v67, 1e-05
  %v70 = vadd.f32 %v68, 1e-05
  %v71 = vrsqrt.pop %v69
  %v72 = vrsqrt.pop %v70
  %v73 = vmul.f32 %v57, %v71
  %v74 = vmul.f32 %v58, %v72
  %v75 = vlaneseq
  %v76 = vshrl.u32 %v75, 7
  %v77 = vsub.s32 0, %v76
  %v78 = vrot.slane %v45, %v77
  %v79 = vmul.f32 %v73, %v78
  %v80 = vmul.f32 %v74, %v78
  %v81 = vlaneseq
  %v82 = vshrl.u32 %v81, 7
  %v83 = vsub.s32 0, %v82
  %v84 = vrot.slane %v46, %v83
  %v85 = vadd.f32 %v79, %v84
  %v86 = vadd.f32 %v80, %v84
  %v87 = vld [vmem:[%s5] sm:$0xf]
  %v88 = vld [vmem:[%s5 + $0x4] sm:$0xf]
  %v89 = vld [vmem:[%s5 + $0x8] sm:$0xf]
  %v90 = vld [vmem:[%s5 + $0xc] sm:$0xf]
  %v91 = vld [vmem:[%s5 + $0x10] sm:$0xf]
  %v92 = vld [vmem:[%s5 + $0x14] sm:$0xf]
  %v93 = vpack.c.bf16 %v86, %v85
  %v94 = vld [vmem:[%s3 + $0x6] sm:$0x1]
  %v95 = vlaneseq
  %v96 = vshrl.u32 %v95, 7
  %v97 = vsub.s32 0, %v96
  %v98 = vrot.slane %v94, %v97
  %v105 = vunpack.c.l.b16 %v87
  %v106 = vunpack.c.l.b16 %v88
  %v107 = vunpack.c.l.b16 %v89
  %v108 = vunpack.c.l.b16 %v90
  %v109 = vunpack.c.l.b16 %v91
  %v110 = vunpack.c.l.b16 %v92
  %v111 = vpack.c.b16 %v106, %v105
  %v112 = vpack.c.b16 %v108, %v107
  %v113 = vpack.c.b16 %v110, %v109
  %v118 = vsel %vm47, %v93, 0
  %120 = vmatprep.subr.bf16.mxu0 0
  %121 = vmatpush1.bf16.msra.mxu0 %v111
  %122 = vmatprep.subr.bf16.mxu0 0
  %123 = vmatpush1.bf16.msra.mxu0 %v112
  %124 = vmatprep.subr.bf16.mxu0 0
  %125 = vmatpush1.bf16.msra.mxu0 %v113
  %126 = vmatprep.subr.bf16.mxu0 0
  %127 = vmatpush1.bf16.msra.mxu0 0
  %128 = vmatprep.subr.bf16.mxu0 0
  %129 = vmatpush1.bf16.msra.mxu0 0
  %130 = vmatprep.subr.bf16.mxu0 0
  %131 = vmatpush1.bf16.msra.mxu0 0
  %132 = vmatprep.subr.bf16.mxu0 0
  %133 = vmatpush1.bf16.msra.mxu0 0
  %134 = vmatprep.subr.bf16.mxu0 0
  %135 = vmatpush1.bf16.msra.mxu0 0
  %136 = vmatprep.subr.bf16.mxu0 0
  %137 = vmatpush1.bf16.msra.mxu0 0
  %138 = vmatprep.subr.bf16.mxu0 0
  %139 = vmatpush1.bf16.msra.mxu0 0
  %140 = vmatprep.subr.bf16.mxu0 0
  %141 = vmatpush1.bf16.msra.mxu0 0
  %142 = vmatprep.subr.bf16.mxu0 0
  %143 = vmatpush1.bf16.msra.mxu0 0
  %144 = vmatprep.subr.bf16.mxu0 0
  %145 = vmatpush1.bf16.msra.mxu0 0
  %146 = vmatprep.subr.bf16.mxu0 0
  %147 = vmatpush1.bf16.msra.mxu0 0
  %148 = vmatprep.subr.bf16.mxu0 0
  %149 = vmatpush1.bf16.msra.mxu0 0
  %150 = vmatprep.subr.bf16.mxu0 0
  %151 = vmatpush1.bf16.msra.mxu0 0
  %152 = vmatprep.mubr.bf16.mxu0 0
  %153 = vmatmul.mubr.bf16.gmra.mrb[0].mxu0 %v118
  %v154 = vpop.f32.mrb[0].mxu0
  %v155 = vadd.f32 %v98, %v154
  %v156 = vpop.f32.mrb[0].mxu0
  %v157 = vpop.f32.mrb[0].mxu0
  %v158 = vadd.f32 %v98, %v157
  %v159 = vpop.f32.mrb[0].mxu0
  %160 = vdwg.mxu0
  %v161 = vld [vmem:[%s3 + $0x2] sm:$0x1]
  %v162 = vld [vmem:[%s3 + $0x3] sm:$0x1]
  %vm163 = vcmask 261120
  %v164 = vsel %vm163, %v155, 0.0
  %165 = vadd.xlane.f32.xlu0 %v164
  %v166 = vpop.xlane.xlu0 %165
  %v167 = vsel %vm163, %v158, 0.0
  %168 = vadd.xlane.f32.xlu0 %v167
  %v169 = vpop.xlane.xlu0 %168
  %v170 = vrcp.pop 32.0
  %v171 = vmul.f32 %v166, %v170
  %v172 = vmul.f32 %v169, %v170
  %v173 = vsub.f32 %v155, %v171
  %v174 = vsub.f32 %v158, %v172
  %v175 = vmul.f32 %v173, %v173
  %v176 = vmul.f32 %v174, %v174
  %v177 = vsel %vm163, %v175, 0.0
  %178 = vadd.xlane.f32.xlu0 %v177
  %v179 = vpop.xlane.xlu0 %178
  %v180 = vsel %vm163, %v176, 0.0
  %181 = vadd.xlane.f32.xlu0 %v180
  %v182 = vpop.xlane.xlu0 %181
  %v183 = vmul.f32 %v179, %v170
  %v184 = vmul.f32 %v182, %v170
  %v185 = vadd.f32 %v183, 1e-05
  %v186 = vadd.f32 %v184, 1e-05
  %v187 = vrsqrt.pop %v185
  %v188 = vrsqrt.pop %v186
  %v189 = vmul.f32 %v173, %v187
  %v190 = vmul.f32 %v174, %v188
  %v191 = vlaneseq
  %v192 = vshrl.u32 %v191, 7
  %v193 = vsub.s32 0, %v192
  %v194 = vrot.slane %v161, %v193
  %v195 = vmul.f32 %v189, %v194
  %v196 = vmul.f32 %v190, %v194
  %v197 = vlaneseq
  %v198 = vshrl.u32 %v197, 7
  %v199 = vsub.s32 0, %v198
  %v200 = vrot.slane %v162, %v199
  %v201 = vadd.f32 %v195, %v200
  %v202 = vadd.f32 %v196, %v200
  %v203 = vld [vmem:[%s3 + $0x4] sm:$0x1]
  %v204 = vld [vmem:[%s3 + $0x5] sm:$0x1]
  %v205 = vsel %vm163, %v41, 0.0
  %206 = vadd.xlane.f32.xlu0 %v205
  %v207 = vpop.xlane.xlu0 %206
  %v208 = vsel %vm163, %v42, 0.0
  %209 = vadd.xlane.f32.xlu0 %v208
  %v210 = vpop.xlane.xlu0 %209
  %v211 = vsel %vm163, %v43, 0.0
  %212 = vadd.xlane.f32.xlu0 %v211
  %v213 = vpop.xlane.xlu0 %212
  %v214 = vsel %vm163, %v44, 0.0
  %215 = vadd.xlane.f32.xlu0 %v214
  %v216 = vpop.xlane.xlu0 %215
  %v217 = vmul.f32 %v207, %v170
  %v218 = vmul.f32 %v210, %v170
  %v219 = vmul.f32 %v213, %v170
  %v220 = vmul.f32 %v216, %v170
  %v221 = vsub.f32 %v41, %v217
  %v222 = vsub.f32 %v42, %v218
  %v223 = vsub.f32 %v43, %v219
  %v224 = vsub.f32 %v44, %v220
  %v225 = vmul.f32 %v221, %v221
  %v226 = vmul.f32 %v222, %v222
  %v227 = vmul.f32 %v223, %v223
  %v228 = vmul.f32 %v224, %v224
  %v229 = vsel %vm163, %v225, 0.0
  %230 = vadd.xlane.f32.xlu0 %v229
  %v231 = vpop.xlane.xlu0 %230
  %v232 = vsel %vm163, %v226, 0.0
  %233 = vadd.xlane.f32.xlu0 %v232
  %v234 = vpop.xlane.xlu0 %233
  %v235 = vsel %vm163, %v227, 0.0
  %236 = vadd.xlane.f32.xlu0 %v235
  %v237 = vpop.xlane.xlu0 %236
  %v238 = vsel %vm163, %v228, 0.0
  %239 = vadd.xlane.f32.xlu0 %v238
  %v240 = vpop.xlane.xlu0 %239
  %v241 = vmul.f32 %v231, %v170
  %v242 = vmul.f32 %v234, %v170
  %v243 = vmul.f32 %v237, %v170
  %v244 = vmul.f32 %v240, %v170
  %v245 = vadd.f32 %v241, 1e-05
  %v246 = vadd.f32 %v242, 1e-05
  %v247 = vadd.f32 %v243, 1e-05
  %v248 = vadd.f32 %v244, 1e-05
  %v249 = vrsqrt.pop %v245
  %v250 = vrsqrt.pop %v246
  %v251 = vrsqrt.pop %v247
  %v252 = vrsqrt.pop %v248
  %v253 = vmul.f32 %v221, %v249
  %v254 = vmul.f32 %v222, %v250
  %v255 = vmul.f32 %v223, %v251
  %v256 = vmul.f32 %v224, %v252
  %v257 = vlaneseq
  %v258 = vshrl.u32 %v257, 7
  %v259 = vsub.s32 0, %v258
  %v260 = vrot.slane %v203, %v259
  %v261 = vmul.f32 %v253, %v260
  %v262 = vmul.f32 %v254, %v260
  %v263 = vmul.f32 %v255, %v260
  %v264 = vmul.f32 %v256, %v260
  %v265 = vlaneseq
  %v266 = vshrl.u32 %v265, 7
  %v267 = vsub.s32 0, %v266
  %v268 = vrot.slane %v204, %v267
  %v269 = vadd.f32 %v261, %v268
  %v270 = vadd.f32 %v262, %v268
  %v271 = vadd.f32 %v263, %v268
  %v272 = vadd.f32 %v264, %v268
  %v273 = vld [vmem:[%s6] sm:$0xf]
  %v274 = vld [vmem:[%s6 + $0x4] sm:$0xf]
  %v275 = vld [vmem:[%s6 + $0x8] sm:$0xf]
  %v276 = vld [vmem:[%s6 + $0xc] sm:$0xf]
  %v277 = vpack.c.bf16 %v202, %v201
  %v278 = vld [vmem:[%s3 + $0x7] sm:$0x1]
  %v279 = vlaneseq
  %v280 = vshrl.u32 %v279, 7
  %v281 = vsub.s32 0, %v280
  %v282 = vrot.slane %v278, %v281
  %v287 = vunpack.c.l.b16 %v273
  %v288 = vunpack.c.l.b16 %v274
  %v289 = vunpack.c.l.b16 %v275
  %v290 = vunpack.c.l.b16 %v276
  %v291 = vpack.c.b16 %v288, %v287
  %v292 = vpack.c.b16 %v290, %v289
  %v296 = vsel %vm163, %v277, 0
  %298 = vmatprep.subr.bf16.mxu0 0
  %299 = vmatpush1.bf16.msra.mxu0 %v291
  %300 = vmatprep.subr.bf16.mxu0 0
  %301 = vmatpush1.bf16.msra.mxu0 %v292
  %302 = vmatprep.subr.bf16.mxu0 0
  %303 = vmatpush1.bf16.msra.mxu0 0
  %304 = vmatprep.subr.bf16.mxu0 0
  %305 = vmatpush1.bf16.msra.mxu0 0
  %306 = vmatprep.subr.bf16.mxu0 0
  %307 = vmatpush1.bf16.msra.mxu0 0
  %308 = vmatprep.subr.bf16.mxu0 0
  %309 = vmatpush1.bf16.msra.mxu0 0
  %310 = vmatprep.subr.bf16.mxu0 0
  %311 = vmatpush1.bf16.msra.mxu0 0
  %312 = vmatprep.subr.bf16.mxu0 0
  %313 = vmatpush1.bf16.msra.mxu0 0
  %314 = vmatprep.subr.bf16.mxu0 0
  %315 = vmatpush1.bf16.msra.mxu0 0
  %316 = vmatprep.subr.bf16.mxu0 0
  %317 = vmatpush1.bf16.msra.mxu0 0
  %318 = vmatprep.subr.bf16.mxu0 0
  %319 = vmatpush1.bf16.msra.mxu0 0
  %320 = vmatprep.subr.bf16.mxu0 0
  %321 = vmatpush1.bf16.msra.mxu0 0
  %322 = vmatprep.subr.bf16.mxu0 0
  %323 = vmatpush1.bf16.msra.mxu0 0
  %324 = vmatprep.subr.bf16.mxu0 0
  %325 = vmatpush1.bf16.msra.mxu0 0
  %326 = vmatprep.subr.bf16.mxu0 0
  %327 = vmatpush1.bf16.msra.mxu0 0
  %328 = vmatprep.subr.bf16.mxu0 0
  %329 = vmatpush1.bf16.msra.mxu0 0
  %330 = vmatprep.mubr.bf16.mxu0 0
  %331 = vmatmul.mubr.bf16.gmra.mrb[0].mxu0 %v296
  %v332 = vpop.f32.mrb[0].mxu0
  %v333 = vadd.f32 %v282, %v332
  %v334 = vpop.f32.mrb[0].mxu0
  %v335 = vpop.f32.mrb[0].mxu0
  %v336 = vadd.f32 %v282, %v335
  %v337 = vpop.f32.mrb[0].mxu0
  %338 = vdwg.mxu0
  %v339 = vld [vmem:[%s7] sm:$0xf]
  %v340 = vld [vmem:[%s7 + $0x4] sm:$0xf]
  %v341 = vld [vmem:[%s7 + $0x8] sm:$0xf]
  %v342 = vld [vmem:[%s7 + $0xc] sm:$0xf]
  %v343 = vpack.c.bf16 %v270, %v269
  %v344 = vpack.c.bf16 %v272, %v271
  %v349 = vunpack.c.l.b16 %v339
  %v350 = vunpack.c.l.b16 %v340
  %v351 = vunpack.c.l.b16 %v341
  %v352 = vunpack.c.l.b16 %v342
  %v353 = vpack.c.b16 %v350, %v349
  %v354 = vpack.c.b16 %v352, %v351
  %v358 = vsel %vm163, %v343, 0
  %v361 = vsel %vm163, %v344, 0
  %363 = vmatprep.subr.bf16.mxu0 0
  %364 = vmatpush1.bf16.msra.mxu0 %v353
  %365 = vmatprep.subr.bf16.mxu0 0
  %366 = vmatpush1.bf16.msra.mxu0 %v354
  %367 = vmatprep.subr.bf16.mxu0 0
  %368 = vmatpush1.bf16.msra.mxu0 0
  %369 = vmatprep.subr.bf16.mxu0 0
  %370 = vmatpush1.bf16.msra.mxu0 0
  %371 = vmatprep.subr.bf16.mxu0 0
  %372 = vmatpush1.bf16.msra.mxu0 0
  %373 = vmatprep.subr.bf16.mxu0 0
  %374 = vmatpush1.bf16.msra.mxu0 0
  %375 = vmatprep.subr.bf16.mxu0 0
  %376 = vmatpush1.bf16.msra.mxu0 0
  %377 = vmatprep.subr.bf16.mxu0 0
  %378 = vmatpush1.bf16.msra.mxu0 0
  %379 = vmatprep.subr.bf16.mxu0 0
  %380 = vmatpush1.bf16.msra.mxu0 0
  %381 = vmatprep.subr.bf16.mxu0 0
  %382 = vmatpush1.bf16.msra.mxu0 0
  %383 = vmatprep.subr.bf16.mxu0 0
  %384 = vmatpush1.bf16.msra.mxu0 0
  %385 = vmatprep.subr.bf16.mxu0 0
  %386 = vmatpush1.bf16.msra.mxu0 0
  %387 = vmatprep.subr.bf16.mxu0 0
  %388 = vmatpush1.bf16.msra.mxu0 0
  %389 = vmatprep.subr.bf16.mxu0 0
  %390 = vmatpush1.bf16.msra.mxu0 0
  %391 = vmatprep.subr.bf16.mxu0 0
  %392 = vmatpush1.bf16.msra.mxu0 0
  %393 = vmatprep.subr.bf16.mxu0 0
  %394 = vmatpush1.bf16.msra.mxu0 0
  %395 = vmatprep.mubr.bf16.mxu0 0
  %396 = vmatmul.mubr.bf16.gmra.mrb[0].mxu0 %v358
  %v397 = vpop.f32.mrb[0].mxu0
  %v398 = vadd.f32 0.0, %v397
  %v399 = vpop.f32.mrb[0].mxu0
  %v400 = vpop.f32.mrb[0].mxu0
  %v401 = vadd.f32 0.0, %v400
  %v402 = vpop.f32.mrb[0].mxu0
  %403 = vmatprep.mubr.bf16.mxu0 0
  %404 = vmatmul.mubr.bf16.gmra.mrb[0].mxu0 %v361
  %v405 = vpop.f32.mrb[0].mxu0
  %v406 = vadd.f32 0.0, %v405
  %v407 = vpop.f32.mrb[0].mxu0
  %v408 = vpop.f32.mrb[0].mxu0
  %v409 = vadd.f32 0.0, %v408
  %v410 = vpop.f32.mrb[0].mxu0
  %411 = vdwg.mxu0
  %v412 = vld [vmem:[%s3 + $0x8] sm:$0x1]
  %v413 = vlaneseq
  %v414 = vshrl.u32 %v413, 7
  %v415 = vsub.s32 0, %v414
  %v416 = vrot.slane %v412, %v415
  %v417 = vadd.f32 %v398, %v416
  %v418 = vadd.f32 %v401, %v416
  %v419 = vadd.f32 %v406, %v416
  %v420 = vadd.f32 %v409, %v416
  %v421 = vld [vmem:[%s3 + $0x9] sm:$0x1]
  %v422 = vlaneseq
  %v423 = vshrl.u32 %v422, 7
  %v424 = vsub.s32 0, %v423
  %v425 = vrot.slane %v421, %v424
  %427 = vrot.lane.b32.xlu0 %v425, 32
  %v428 = vpop.permute.xlu0 %427
  %v430 = vadd.f32 %v398, %v428
  %v431 = vadd.f32 %v401, %v428
  %v432 = vadd.f32 %v406, %v428
  %v433 = vadd.f32 %v409, %v428
  %vm434 = vcmask 64512
  %v436 = vsel %vm434, %v333, 0
  %v439 = vsel %vm434, %v417, 0
  %v442 = vsel %vm434, %v418, 0
  %444 = vmatprep.subr.mxu0 0.0
  %445 = vmatpush1.xpose.msra.mxu0 %v439
  %446 = vmatprep.subr.mxu0 0.0
  %447 = vmatpush1.xpose.msra.mxu0 %v442
  %448 = vmatprep.subr.mxu0 0.0
  %449 = vmatpush1.xpose.msra.mxu0 0.0
  %450 = vmatprep.subr.mxu0 0.0
  %451 = vmatpush1.xpose.msra.mxu0 0.0
  %452 = vmatprep.subr.mxu0 0.0
  %453 = vmatpush1.xpose.msra.mxu0 0.0
  %454 = vmatprep.subr.mxu0 0.0
  %455 = vmatpush1.xpose.msra.mxu0 0.0
  %456 = vmatprep.subr.mxu0 0.0
  %457 = vmatpush1.xpose.msra.mxu0 0.0
  %458 = vmatprep.subr.mxu0 0.0
  %459 = vmatpush1.xpose.msra.mxu0 0.0
  %460 = vmatprep.subr.mxu0 0.0
  %461 = vmatpush1.xpose.msra.mxu0 0.0
  %462 = vmatprep.subr.mxu0 0.0
  %463 = vmatpush1.xpose.msra.mxu0 0.0
  %464 = vmatprep.subr.mxu0 0.0
  %465 = vmatpush1.xpose.msra.mxu0 0.0
  %466 = vmatprep.subr.mxu0 0.0
  %467 = vmatpush1.xpose.msra.mxu0 0.0
  %468 = vmatprep.subr.mxu0 0.0
  %469 = vmatpush1.xpose.msra.mxu0 0.0
  %470 = vmatprep.subr.mxu0 0.0
  %471 = vmatpush1.xpose.msra.mxu0 0.0
  %472 = vmatprep.subr.mxu0 0.0
  %473 = vmatpush1.xpose.msra.mxu0 0.0
  %474 = vmatprep.subr.mxu0 0.0
  %475 = vmatpush1.xpose.msra.mxu0 0.0
  %476 = vmatprep.subr.mxu0 0.0
  %477 = vmatpush1.xpose.msra.mxu0 0.0
  %478 = vmatprep.subr.mxu0 0.0
  %479 = vmatpush1.xpose.msra.mxu0 0.0
  %480 = vmatprep.subr.mxu0 0.0
  %481 = vmatpush1.xpose.msra.mxu0 0.0
  %482 = vmatprep.subr.mxu0 0.0
  %483 = vmatpush1.xpose.msra.mxu0 0.0
  %484 = vmatprep.subr.mxu0 0.0
  %485 = vmatpush1.xpose.msra.mxu0 0.0
  %486 = vmatprep.subr.mxu0 0.0
  %487 = vmatpush1.xpose.msra.mxu0 0.0
  %488 = vmatprep.subr.mxu0 0.0
  %489 = vmatpush1.xpose.msra.mxu0 0.0
  %490 = vmatprep.subr.mxu0 0.0
  %491 = vmatpush1.xpose.msra.mxu0 0.0
  %492 = vmatprep.subr.mxu0 0.0
  %493 = vmatpush1.xpose.msra.mxu0 0.0
  %494 = vmatprep.subr.mxu0 0.0
  %495 = vmatpush1.xpose.msra.mxu0 0.0
  %496 = vmatprep.subr.mxu0 0.0
  %497 = vmatpush1.xpose.msra.mxu0 0.0
  %498 = vmatprep.subr.mxu0 0.0
  %499 = vmatpush1.xpose.msra.mxu0 0.0
  %500 = vmatprep.subr.mxu0 0.0
  %501 = vmatpush1.xpose.msra.mxu0 0.0
  %502 = vmatprep.subr.mxu0 0.0
  %503 = vmatpush1.xpose.msra.mxu0 0.0
  %504 = vmatprep.subr.mxu0 0.0
  %505 = vmatpush1.xpose.msra.mxu0 0.0
  %506 = vmatprep.subr.mxu0 0.0
  %507 = vmatpush1.xpose.msra.mxu0 0.0
  %508 = vmatprep.mubr.f32.mxu0 0.0
  %509 = vmatmul.mubr.f32.gmra.mrb[0].mxu0 %v436
  %v510 = vpop.f32.mrb[0].mxu0
  %v511 = vadd.f32 0.0, %v510
  %v512 = vpop.f32.mrb[0].mxu0
  %513 = vdwg.mxu0
  %v514 = vmul.f32 %v511, 0.35355338
  %vm515 = vcmask 130048
  %v516 = vsel %vm515, %v514, -inf
  %517 = vmax.xlane.f32.xlu0 %v516
  %v518 = vpop.xlane.xlu0 %517
  %v519 = vsub.f32 %v514, %v518
  %v520 = vmul.f32 %v519, 1.442695
  %v521 = vpow.pop %v520
  %v522 = vsel %vm515, %v521, 0.0
  %523 = vadd.xlane.f32.xlu0 %v522
  %v524 = vpop.xlane.xlu0 %523
  %v525 = vrcp.pop %v524
  %v526 = vmul.f32 %v521, %v525
  %529 = vrot.lane.b32.xlu0 %v430, 96
  %v530 = vpop.permute.xlu0 %529
  %531 = vrot.lane.b32.xlu0 %v431, 96
  %v532 = vpop.permute.xlu0 %531
  %v536 = vsel %vm515, %v526, 0
  %538 = vmatprep.subr.mxu0 0.0
  %539 = vmatpush1.msra.mxu0 %v530
  %540 = vmatprep.subr.mxu0 0.0
  %541 = vmatpush1.msra.mxu0 %v532
  %542 = vmatprep.subr.mxu0 0.0
  %543 = vmatpush1.msra.mxu0 0.0
  %544 = vmatprep.subr.mxu0 0.0
  %545 = vmatpush1.msra.mxu0 0.0
  %546 = vmatprep.subr.mxu0 0.0
  %547 = vmatpush1.msra.mxu0 0.0
  %548 = vmatprep.subr.mxu0 0.0
  %549 = vmatpush1.msra.mxu0 0.0
  %550 = vmatprep.subr.mxu0 0.0
  %551 = vmatpush1.msra.mxu0 0.0
  %552 = vmatprep.subr.mxu0 0.0
  %553 = vmatpush1.msra.mxu0 0.0
  %554 = vmatprep.subr.mxu0 0.0
  %555 = vmatpush1.msra.mxu0 0.0
  %556 = vmatprep.subr.mxu0 0.0
  %557 = vmatpush1.msra.mxu0 0.0
  %558 = vmatprep.subr.mxu0 0.0
  %559 = vmatpush1.msra.mxu0 0.0
  %560 = vmatprep.subr.mxu0 0.0
  %561 = vmatpush1.msra.mxu0 0.0
  %562 = vmatprep.subr.mxu0 0.0
  %563 = vmatpush1.msra.mxu0 0.0
  %564 = vmatprep.subr.mxu0 0.0
  %565 = vmatpush1.msra.mxu0 0.0
  %566 = vmatprep.subr.mxu0 0.0
  %567 = vmatpush1.msra.mxu0 0.0
  %568 = vmatprep.subr.mxu0 0.0
  %569 = vmatpush1.msra.mxu0 0.0
  %570 = vmatprep.subr.mxu0 0.0
  %571 = vmatpush1.msra.mxu0 0.0
  %572 = vmatprep.subr.mxu0 0.0
  %573 = vmatpush1.msra.mxu0 0.0
  %574 = vmatprep.subr.mxu0 0.0
  %575 = vmatpush1.msra.mxu0 0.0
  %576 = vmatprep.subr.mxu0 0.0
  %577 = vmatpush1.msra.mxu0 0.0
  %578 = vmatprep.subr.mxu0 0.0
  %579 = vmatpush1.msra.mxu0 0.0
  %580 = vmatprep.subr.mxu0 0.0
  %581 = vmatpush1.msra.mxu0 0.0
  %582 = vmatprep.subr.mxu0 0.0
  %583 = vmatpush1.msra.mxu0 0.0
  %584 = vmatprep.subr.mxu0 0.0
  %585 = vmatpush1.msra.mxu0 0.0
  %586 = vmatprep.subr.mxu0 0.0
  %587 = vmatpush1.msra.mxu0 0.0
  %588 = vmatprep.subr.mxu0 0.0
  %589 = vmatpush1.msra.mxu0 0.0
  %590 = vmatprep.subr.mxu0 0.0
  %591 = vmatpush1.msra.mxu0 0.0
  %592 = vmatprep.subr.mxu0 0.0
  %593 = vmatpush1.msra.mxu0 0.0
  %594 = vmatprep.subr.mxu0 0.0
  %595 = vmatpush1.msra.mxu0 0.0
  %596 = vmatprep.subr.mxu0 0.0
  %597 = vmatpush1.msra.mxu0 0.0
  %598 = vmatprep.subr.mxu0 0.0
  %599 = vmatpush1.msra.mxu0 0.0
  %600 = vmatprep.subr.mxu0 0.0
  %601 = vmatpush1.msra.mxu0 0.0
  %602 = vmatprep.mubr.f32.mxu0 0.0
  %603 = vmatmul.mubr.f32.gmra.mrb[0].mxu0 %v536
  %v604 = vpop.f32.mrb[0].mxu0
  %v605 = vadd.f32 0.0, %v604
  %v606 = vpop.f32.mrb[0].mxu0
  %607 = vdwg.mxu0
  %608 = vst.msk [vmem:[#allocation2] sm:$0xff] %vm434, %v605
  %609 = vrot.lane.b32.xlu0 %v333, 120
  %v610 = vpop.permute.xlu0 %609
  %611 = vrot.lane.b32.xlu0 %v417, 120
  %v612 = vpop.permute.xlu0 %611
  %613 = vrot.lane.b32.xlu0 %v418, 120
  %v614 = vpop.permute.xlu0 %613
  %v615 = vsel %vm434, %v610, 0
  %v617 = vsel %vm434, %v612, 0
  %v619 = vsel %vm434, %v614, 0
  %621 = vmatprep.subr.mxu0 0.0
  %622 = vmatpush1.xpose.msra.mxu0 %v617
  %623 = vmatprep.subr.mxu0 0.0
  %624 = vmatpush1.xpose.msra.mxu0 %v619
  %625 = vmatprep.subr.mxu0 0.0
  %626 = vmatpush1.xpose.msra.mxu0 0.0
  %627 = vmatprep.subr.mxu0 0.0
  %628 = vmatpush1.xpose.msra.mxu0 0.0
  %629 = vmatprep.subr.mxu0 0.0
  %630 = vmatpush1.xpose.msra.mxu0 0.0
  %631 = vmatprep.subr.mxu0 0.0
  %632 = vmatpush1.xpose.msra.mxu0 0.0
  %633 = vmatprep.subr.mxu0 0.0
  %634 = vmatpush1.xpose.msra.mxu0 0.0
  %635 = vmatprep.subr.mxu0 0.0
  %636 = vmatpush1.xpose.msra.mxu0 0.0
  %637 = vmatprep.subr.mxu0 0.0
  %638 = vmatpush1.xpose.msra.mxu0 0.0
  %639 = vmatprep.subr.mxu0 0.0
  %640 = vmatpush1.xpose.msra.mxu0 0.0
  %641 = vmatprep.subr.mxu0 0.0
  %642 = vmatpush1.xpose.msra.mxu0 0.0
  %643 = vmatprep.subr.mxu0 0.0
  %644 = vmatpush1.xpose.msra.mxu0 0.0
  %645 = vmatprep.subr.mxu0 0.0
  %646 = vmatpush1.xpose.msra.mxu0 0.0
  %647 = vmatprep.subr.mxu0 0.0
  %648 = vmatpush1.xpose.msra.mxu0 0.0
  %649 = vmatprep.subr.mxu0 0.0
  %650 = vmatpush1.xpose.msra.mxu0 0.0
  %651 = vmatprep.subr.mxu0 0.0
  %652 = vmatpush1.xpose.msra.mxu0 0.0
  %653 = vmatprep.subr.mxu0 0.0
  %654 = vmatpush1.xpose.msra.mxu0 0.0
  %655 = vmatprep.subr.mxu0 0.0
  %656 = vmatpush1.xpose.msra.mxu0 0.0
  %657 = vmatprep.subr.mxu0 0.0
  %658 = vmatpush1.xpose.msra.mxu0 0.0
  %659 = vmatprep.subr.mxu0 0.0
  %660 = vmatpush1.xpose.msra.mxu0 0.0
  %661 = vmatprep.subr.mxu0 0.0
  %662 = vmatpush1.xpose.msra.mxu0 0.0
  %663 = vmatprep.subr.mxu0 0.0
  %664 = vmatpush1.xpose.msra.mxu0 0.0
  %665 = vmatprep.subr.mxu0 0.0
  %666 = vmatpush1.xpose.msra.mxu0 0.0
  %667 = vmatprep.subr.mxu0 0.0
  %668 = vmatpush1.xpose.msra.mxu0 0.0
  %669 = vmatprep.subr.mxu0 0.0
  %670 = vmatpush1.xpose.msra.mxu0 0.0
  %671 = vmatprep.subr.mxu0 0.0
  %672 = vmatpush1.xpose.msra.mxu0 0.0
  %673 = vmatprep.subr.mxu0 0.0
  %674 = vmatpush1.xpose.msra.mxu0 0.0
  %675 = vmatprep.subr.mxu0 0.0
  %676 = vmatpush1.xpose.msra.mxu0 0.0
  %677 = vmatprep.subr.mxu0 0.0
  %678 = vmatpush1.xpose.msra.mxu0 0.0
  %679 = vmatprep.subr.mxu0 0.0
  %680 = vmatpush1.xpose.msra.mxu0 0.0
  %681 = vmatprep.subr.mxu0 0.0
  %682 = vmatpush1.xpose.msra.mxu0 0.0
  %683 = vmatprep.subr.mxu0 0.0
  %684 = vmatpush1.xpose.msra.mxu0 0.0
  %685 = vmatprep.mubr.f32.mxu0 0.0
  %686 = vmatmul.mubr.f32.gmra.mrb[0].mxu0 %v615
  %v687 = vpop.f32.mrb[0].mxu0
  %v688 = vadd.f32 0.0, %v687
  %v689 = vpop.f32.mrb[0].mxu0
  %690 = vdwg.mxu0
  %v691 = vmul.f32 %v688, 0.35355338
  %v692 = vsel %vm515, %v691, -inf
  %693 = vmax.xlane.f32.xlu0 %v692
  %v694 = vpop.xlane.xlu0 %693
  %v695 = vsub.f32 %v691, %v694
  %v696 = vmul.f32 %v695, 1.442695
  %v697 = vpow.pop %v696
  %v698 = vsel %vm515, %v697, 0.0
  %699 = vadd.xlane.f32.xlu0 %v698
  %v700 = vpop.xlane.xlu0 %699
  %v701 = vrcp.pop %v700
  %v702 = vmul.f32 %v697, %v701
  %703 = vrot.lane.b32.xlu0 %v430, 88
  %v704 = vpop.permute.xlu0 %703
  %705 = vrot.lane.b32.xlu0 %v431, 88
  %v706 = vpop.permute.xlu0 %705
  %v710 = vsel %vm515, %v702, 0
  %712 = vmatprep.subr.mxu0 0.0
  %713 = vmatpush1.msra.mxu0 %v704
  %714 = vmatprep.subr.mxu0 0.0
  %715 = vmatpush1.msra.mxu0 %v706
  %716 = vmatprep.subr.mxu0 0.0
  %717 = vmatpush1.msra.mxu0 0.0
  %718 = vmatprep.subr.mxu0 0.0
  %719 = vmatpush1.msra.mxu0 0.0
  %720 = vmatprep.subr.mxu0 0.0
  %721 = vmatpush1.msra.mxu0 0.0
  %722 = vmatprep.subr.mxu0 0.0
  %723 = vmatpush1.msra.mxu0 0.0
  %724 = vmatprep.subr.mxu0 0.0
  %725 = vmatpush1.msra.mxu0 0.0
  %726 = vmatprep.subr.mxu0 0.0
  %727 = vmatpush1.msra.mxu0 0.0
  %728 = vmatprep.subr.mxu0 0.0
  %729 = vmatpush1.msra.mxu0 0.0
  %730 = vmatprep.subr.mxu0 0.0
  %731 = vmatpush1.msra.mxu0 0.0
  %732 = vmatprep.subr.mxu0 0.0
  %733 = vmatpush1.msra.mxu0 0.0
  %734 = vmatprep.subr.mxu0 0.0
  %735 = vmatpush1.msra.mxu0 0.0
  %736 = vmatprep.subr.mxu0 0.0
  %737 = vmatpush1.msra.mxu0 0.0
  %738 = vmatprep.subr.mxu0 0.0
  %739 = vmatpush1.msra.mxu0 0.0
  %740 = vmatprep.subr.mxu0 0.0
  %741 = vmatpush1.msra.mxu0 0.0
  %742 = vmatprep.subr.mxu0 0.0
  %743 = vmatpush1.msra.mxu0 0.0
  %744 = vmatprep.subr.mxu0 0.0
  %745 = vmatpush1.msra.mxu0 0.0
  %746 = vmatprep.subr.mxu0 0.0
  %747 = vmatpush1.msra.mxu0 0.0
  %748 = vmatprep.subr.mxu0 0.0
  %749 = vmatpush1.msra.mxu0 0.0
  %750 = vmatprep.subr.mxu0 0.0
  %751 = vmatpush1.msra.mxu0 0.0
  %752 = vmatprep.subr.mxu0 0.0
  %753 = vmatpush1.msra.mxu0 0.0
  %754 = vmatprep.subr.mxu0 0.0
  %755 = vmatpush1.msra.mxu0 0.0
  %756 = vmatprep.subr.mxu0 0.0
  %757 = vmatpush1.msra.mxu0 0.0
  %758 = vmatprep.subr.mxu0 0.0
  %759 = vmatpush1.msra.mxu0 0.0
  %760 = vmatprep.subr.mxu0 0.0
  %761 = vmatpush1.msra.mxu0 0.0
  %762 = vmatprep.subr.mxu0 0.0
  %763 = vmatpush1.msra.mxu0 0.0
  %764 = vmatprep.subr.mxu0 0.0
  %765 = vmatpush1.msra.mxu0 0.0
  %766 = vmatprep.subr.mxu0 0.0
  %767 = vmatpush1.msra.mxu0 0.0
  %768 = vmatprep.subr.mxu0 0.0
  %769 = vmatpush1.msra.mxu0 0.0
  %770 = vmatprep.subr.mxu0 0.0
  %771 = vmatpush1.msra.mxu0 0.0
  %772 = vmatprep.subr.mxu0 0.0
  %773 = vmatpush1.msra.mxu0 0.0
  %774 = vmatprep.subr.mxu0 0.0
  %775 = vmatpush1.msra.mxu0 0.0
  %776 = vmatprep.mubr.f32.mxu0 0.0
  %777 = vmatmul.mubr.f32.gmra.mrb[0].mxu0 %v710
  %v778 = vpop.f32.mrb[0].mxu0
  %v779 = vadd.f32 0.0, %v778
  %v780 = vpop.f32.mrb[0].mxu0
  %781 = vdwg.mxu0
  %783 = vrot.lane.b32.xlu0 %v779, 8
  %v784 = vpop.permute.xlu0 %783
  %vm786 = vcmask 130112
  %787 = vst.msk [vmem:[#allocation2] sm:$0xff] %vm786, %v784
  %788 = vrot.lane.b32.xlu0 %v333, 112
  %v789 = vpop.permute.xlu0 %788
  %790 = vrot.lane.b32.xlu0 %v417, 112
  %v791 = vpop.permute.xlu0 %790
  %792 = vrot.lane.b32.xlu0 %v418, 112
  %v793 = vpop.permute.xlu0 %792
  %v794 = vsel %vm434, %v789, 0
  %v796 = vsel %vm434, %v791, 0
  %v798 = vsel %vm434, %v793, 0
  %800 = vmatprep.subr.mxu0 0.0
  %801 = vmatpush1.xpose.msra.mxu0 %v796
  %802 = vmatprep.subr.mxu0 0.0
  %803 = vmatpush1.xpose.msra.mxu0 %v798
  %804 = vmatprep.subr.mxu0 0.0
  %805 = vmatpush1.xpose.msra.mxu0 0.0
  %806 = vmatprep.subr.mxu0 0.0
  %807 = vmatpush1.xpose.msra.mxu0 0.0
  %808 = vmatprep.subr.mxu0 0.0
  %809 = vmatpush1.xpose.msra.mxu0 0.0
  %810 = vmatprep.subr.mxu0 0.0
  %811 = vmatpush1.xpose.msra.mxu0 0.0
  %812 = vmatprep.subr.mxu0 0.0
  %813 = vmatpush1.xpose.msra.mxu0 0.0
  %814 = vmatprep.subr.mxu0 0.0
  %815 = vmatpush1.xpose.msra.mxu0 0.0
  %816 = vmatprep.subr.mxu0 0.0
  %817 = vmatpush1.xpose.msra.mxu0 0.0
  %818 = vmatprep.subr.mxu0 0.0
  %819 = vmatpush1.xpose.msra.mxu0 0.0
  %820 = vmatprep.subr.mxu0 0.0
  %821 = vmatpush1.xpose.msra.mxu0 0.0
  %822 = vmatprep.subr.mxu0 0.0
  %823 = vmatpush1.xpose.msra.mxu0 0.0
  %824 = vmatprep.subr.mxu0 0.0
  %825 = vmatpush1.xpose.msra.mxu0 0.0
  %826 = vmatprep.subr.mxu0 0.0
  %827 = vmatpush1.xpose.msra.mxu0 0.0
  %828 = vmatprep.subr.mxu0 0.0
  %829 = vmatpush1.xpose.msra.mxu0 0.0
  %830 = vmatprep.subr.mxu0 0.0
  %831 = vmatpush1.xpose.msra.mxu0 0.0
  %832 = vmatprep.subr.mxu0 0.0
  %833 = vmatpush1.xpose.msra.mxu0 0.0
  %834 = vmatprep.subr.mxu0 0.0
  %835 = vmatpush1.xpose.msra.mxu0 0.0
  %836 = vmatprep.subr.mxu0 0.0
  %837 = vmatpush1.xpose.msra.mxu0 0.0
  %838 = vmatprep.subr.mxu0 0.0
  %839 = vmatpush1.xpose.msra.mxu0 0.0
  %840 = vmatprep.subr.mxu0 0.0
  %841 = vmatpush1.xpose.msra.mxu0 0.0
  %842 = vmatprep.subr.mxu0 0.0
  %843 = vmatpush1.xpose.msra.mxu0 0.0
  %844 = vmatprep.subr.mxu0 0.0
  %845 = vmatpush1.xpose.msra.mxu0 0.0
  %846 = vmatprep.subr.mxu0 0.0
  %847 = vmatpush1.xpose.msra.mxu0 0.0
  %848 = vmatprep.subr.mxu0 0.0
  %849 = vmatpush1.xpose.msra.mxu0 0.0
  %850 = vmatprep.subr.mxu0 0.0
  %851 = vmatpush1.xpose.msra.mxu0 0.0
  %852 = vmatprep.subr.mxu0 0.0
  %853 = vmatpush1.xpose.msra.mxu0 0.0
  %854 = vmatprep.subr.mxu0 0.0
  %855 = vmatpush1.xpose.msra.mxu0 0.0
  %856 = vmatprep.subr.mxu0 0.0
  %857 = vmatpush1.xpose.msra.mxu0 0.0
  %858 = vmatprep.subr.mxu0 0.0
  %859 = vmatpush1.xpose.msra.mxu0 0.0
  %860 = vmatprep.subr.mxu0 0.0
  %861 = vmatpush1.xpose.msra.mxu0 0.0
  %862 = vmatprep.subr.mxu0 0.0
  %863 = vmatpush1.xpose.msra.mxu0 0.0
  %864 = vmatprep.mubr.f32.mxu0 0.0
  %865 = vmatmul.mubr.f32.gmra.mrb[0].mxu0 %v794
  %v866 = vpop.f32.mrb[0].mxu0
  %v867 = vadd.f32 0.0, %v866
  %v868 = vpop.f32.mrb[0].mxu0
  %869 = vdwg.mxu0
  %v870 = vmul.f32 %v867, 0.35355338
  %v871 = vsel %vm515, %v870, -inf
  %872 = vmax.xlane.f32.xlu0 %v871
  %v873 = vpop.xlane.xlu0 %872
  %v874 = vsub.f32 %v870, %v873
  %v875 = vmul.f32 %v874, 1.442695
  %v876 = vpow.pop %v875
  %v877 = vsel %vm515, %v876, 0.0
  %878 = vadd.xlane.f32.xlu0 %v877
  %v879 = vpop.xlane.xlu0 %878
  %v880 = vrcp.pop %v879
  %v881 = vmul.f32 %v876, %v880
  %882 = vrot.lane.b32.xlu0 %v430, 80
  %v883 = vpop.permute.xlu0 %882
  %884 = vrot.lane.b32.xlu0 %v431, 80
  %v885 = vpop.permute.xlu0 %884
  %v889 = vsel %vm515, %v881, 0
  %891 = vmatprep.subr.mxu0 0.0
  %892 = vmatpush1.msra.mxu0 %v883
  %893 = vmatprep.subr.mxu0 0.0
  %894 = vmatpush1.msra.mxu0 %v885
  %895 = vmatprep.subr.mxu0 0.0
  %896 = vmatpush1.msra.mxu0 0.0
  %897 = vmatprep.subr.mxu0 0.0
  %898 = vmatpush1.msra.mxu0 0.0
  %899 = vmatprep.subr.mxu0 0.0
  %900 = vmatpush1.msra.mxu0 0.0
  %901 = vmatprep.subr.mxu0 0.0
  %902 = vmatpush1.msra.mxu0 0.0
  %903 = vmatprep.subr.mxu0 0.0
  %904 = vmatpush1.msra.mxu0 0.0
  %905 = vmatprep.subr.mxu0 0.0
  %906 = vmatpush1.msra.mxu0 0.0
  %907 = vmatprep.subr.mxu0 0.0
  %908 = vmatpush1.msra.mxu0 0.0
  %909 = vmatprep.subr.mxu0 0.0
  %910 = vmatpush1.msra.mxu0 0.0
  %911 = vmatprep.subr.mxu0 0.0
  %912 = vmatpush1.msra.mxu0 0.0
  %913 = vmatprep.subr.mxu0 0.0
  %914 = vmatpush1.msra.mxu0 0.0
  %915 = vmatprep.subr.mxu0 0.0
  %916 = vmatpush1.msra.mxu0 0.0
  %917 = vmatprep.subr.mxu0 0.0
  %918 = vmatpush1.msra.mxu0 0.0
  %919 = vmatprep.subr.mxu0 0.0
  %920 = vmatpush1.msra.mxu0 0.0
  %921 = vmatprep.subr.mxu0 0.0
  %922 = vmatpush1.msra.mxu0 0.0
  %923 = vmatprep.subr.mxu0 0.0
  %924 = vmatpush1.msra.mxu0 0.0
  %925 = vmatprep.subr.mxu0 0.0
  %926 = vmatpush1.msra.mxu0 0.0
  %927 = vmatprep.subr.mxu0 0.0
  %928 = vmatpush1.msra.mxu0 0.0
  %929 = vmatprep.subr.mxu0 0.0
  %930 = vmatpush1.msra.mxu0 0.0
  %931 = vmatprep.subr.mxu0 0.0
  %932 = vmatpush1.msra.mxu0 0.0
  %933 = vmatprep.subr.mxu0 0.0
  %934 = vmatpush1.msra.mxu0 0.0
  %935 = vmatprep.subr.mxu0 0.0
  %936 = vmatpush1.msra.mxu0 0.0
  %937 = vmatprep.subr.mxu0 0.0
  %938 = vmatpush1.msra.mxu0 0.0
  %939 = vmatprep.subr.mxu0 0.0
  %940 = vmatpush1.msra.mxu0 0.0
  %941 = vmatprep.subr.mxu0 0.0
  %942 = vmatpush1.msra.mxu0 0.0
  %943 = vmatprep.subr.mxu0 0.0
  %944 = vmatpush1.msra.mxu0 0.0
  %945 = vmatprep.subr.mxu0 0.0
  %946 = vmatpush1.msra.mxu0 0.0
  %947 = vmatprep.subr.mxu0 0.0
  %948 = vmatpush1.msra.mxu0 0.0
  %949 = vmatprep.subr.mxu0 0.0
  %950 = vmatpush1.msra.mxu0 0.0
  %951 = vmatprep.subr.mxu0 0.0
  %952 = vmatpush1.msra.mxu0 0.0
  %953 = vmatprep.subr.mxu0 0.0
  %954 = vmatpush1.msra.mxu0 0.0
  %955 = vmatprep.mubr.f32.mxu0 0.0
  %956 = vmatmul.mubr.f32.gmra.mrb[0].mxu0 %v889
  %v957 = vpop.f32.mrb[0].mxu0
  %v958 = vadd.f32 0.0, %v957
  %v959 = vpop.f32.mrb[0].mxu0
  %960 = vdwg.mxu0
  %962 = vrot.lane.b32.xlu0 %v958, 16
  %v963 = vpop.permute.xlu0 %962
  %vm965 = vcmask 195712
  %966 = vst.msk [vmem:[#allocation2] sm:$0xff] %vm965, %v963
  %967 = vrot.lane.b32.xlu0 %v333, 104
  %v968 = vpop.permute.xlu0 %967
  %969 = vrot.lane.b32.xlu0 %v417, 104
  %v970 = vpop.permute.xlu0 %969
  %971 = vrot.lane.b32.xlu0 %v418, 104
  %v972 = vpop.permute.xlu0 %971
  %v973 = vsel %vm434, %v968, 0
  %v975 = vsel %vm434, %v970, 0
  %v977 = vsel %vm434, %v972, 0
  %979 = vmatprep.subr.mxu0 0.0
  %980 = vmatpush1.xpose.msra.mxu0 %v975
  %981 = vmatprep.subr.mxu0 0.0
  %982 = vmatpush1.xpose.msra.mxu0 %v977
  %983 = vmatprep.subr.mxu0 0.0
  %984 = vmatpush1.xpose.msra.mxu0 0.0
  %985 = vmatprep.subr.mxu0 0.0
  %986 = vmatpush1.xpose.msra.mxu0 0.0
  %987 = vmatprep.subr.mxu0 0.0
  %988 = vmatpush1.xpose.msra.mxu0 0.0
  %989 = vmatprep.subr.mxu0 0.0
  %990 = vmatpush1.xpose.msra.mxu0 0.0
  %991 = vmatprep.subr.mxu0 0.0
  %992 = vmatpush1.xpose.msra.mxu0 0.0
  %993 = vmatprep.subr.mxu0 0.0
  %994 = vmatpush1.xpose.msra.mxu0 0.0
  %995 = vmatprep.subr.mxu0 0.0
  %996 = vmatpush1.xpose.msra.mxu0 0.0
  %997 = vmatprep.subr.mxu0 0.0
  %998 = vmatpush1.xpose.msra.mxu0 0.0
  %999 = vmatprep.subr.mxu0 0.0
  %1000 = vmatpush1.xpose.msra.mxu0 0.0
  %1001 = vmatprep.subr.mxu0 0.0
  %1002 = vmatpush1.xpose.msra.mxu0 0.0
  %1003 = vmatprep.subr.mxu0 0.0
  %1004 = vmatpush1.xpose.msra.mxu0 0.0
  %1005 = vmatprep.subr.mxu0 0.0
  %1006 = vmatpush1.xpose.msra.mxu0 0.0
  %1007 = vmatprep.subr.mxu0 0.0
  %1008 = vmatpush1.xpose.msra.mxu0 0.0
  %1009 = vmatprep.subr.mxu0 0.0
  %1010 = vmatpush1.xpose.msra.mxu0 0.0
  %1011 = vmatprep.subr.mxu0 0.0
  %1012 = vmatpush1.xpose.msra.mxu0 0.0
  %1013 = vmatprep.subr.mxu0 0.0
  %1014 = vmatpush1.xpose.msra.mxu0 0.0
  %1015 = vmatprep.subr.mxu0 0.0
  %1016 = vmatpush1.xpose.msra.mxu0 0.0
  %1017 = vmatprep.subr.mxu0 0.0
  %1018 = vmatpush1.xpose.msra.mxu0 0.0
  %1019 = vmatprep.subr.mxu0 0.0
  %1020 = vmatpush1.xpose.msra.mxu0 0.0
  %1021 = vmatprep.subr.mxu0 0.0
  %1022 = vmatpush1.xpose.msra.mxu0 0.0
  %1023 = vmatprep.subr.mxu0 0.0
  %1024 = vmatpush1.xpose.msra.mxu0 0.0
  %1025 = vmatprep.subr.mxu0 0.0
  %1026 = vmatpush1.xpose.msra.mxu0 0.0
  %1027 = vmatprep.subr.mxu0 0.0
  %1028 = vmatpush1.xpose.msra.mxu0 0.0
  %1029 = vmatprep.subr.mxu0 0.0
  %1030 = vmatpush1.xpose.msra.mxu0 0.0
  %1031 = vmatprep.subr.mxu0 0.0
  %1032 = vmatpush1.xpose.msra.mxu0 0.0
  %1033 = vmatprep.subr.mxu0 0.0
  %1034 = vmatpush1.xpose.msra.mxu0 0.0
  %1035 = vmatprep.subr.mxu0 0.0
  %1036 = vmatpush1.xpose.msra.mxu0 0.0
  %1037 = vmatprep.subr.mxu0 0.0
  %1038 = vmatpush1.xpose.msra.mxu0 0.0
  %1039 = vmatprep.subr.mxu0 0.0
  %1040 = vmatpush1.xpose.msra.mxu0 0.0
  %1041 = vmatprep.subr.mxu0 0.0
  %1042 = vmatpush1.xpose.msra.mxu0 0.0
  %1043 = vmatprep.mubr.f32.mxu0 0.0
  %1044 = vmatmul.mubr.f32.gmra.mrb[0].mxu0 %v973
  %v1045 = vpop.f32.mrb[0].mxu0
  %v1046 = vadd.f32 0.0, %v1045
  %v1047 = vpop.f32.mrb[0].mxu0
  %1048 = vdwg.mxu0
  %v1049 = vmul.f32 %v1046, 0.35355338
  %v1050 = vsel %vm515, %v1049, -inf
  %1051 = vmax.xlane.f32.xlu0 %v1050
  %v1052 = vpop.xlane.xlu0 %1051
  %v1053 = vsub.f32 %v1049, %v1052
  %v1054 = vmul.f32 %v1053, 1.442695
  %v1055 = vpow.pop %v1054
  %v1056 = vsel %vm515, %v1055, 0.0
  %1057 = vadd.xlane.f32.xlu0 %v1056
  %v1058 = vpop.xlane.xlu0 %1057
  %v1059 = vrcp.pop %v1058
  %v1060 = vmul.f32 %v1055, %v1059
  %1061 = vrot.lane.b32.xlu0 %v430, 72
  %v1062 = vpop.permute.xlu0 %1061
  %1063 = vrot.lane.b32.xlu0 %v431, 72
  %v1064 = vpop.permute.xlu0 %1063
  %v1068 = vsel %vm515, %v1060, 0
  %1070 = vmatprep.subr.mxu0 0.0
  %1071 = vmatpush1.msra.mxu0 %v1062
  %1072 = vmatprep.subr.mxu0 0.0
  %1073 = vmatpush1.msra.mxu0 %v1064
  %1074 = vmatprep.subr.mxu0 0.0
  %1075 = vmatpush1.msra.mxu0 0.0
  %1076 = vmatprep.subr.mxu0 0.0
  %1077 = vmatpush1.msra.mxu0 0.0
  %1078 = vmatprep.subr.mxu0 0.0
  %1079 = vmatpush1.msra.mxu0 0.0
  %1080 = vmatprep.subr.mxu0 0.0
  %1081 = vmatpush1.msra.mxu0 0.0
  %1082 = vmatprep.subr.mxu0 0.0
  %1083 = vmatpush1.msra.mxu0 0.0
  %1084 = vmatprep.subr.mxu0 0.0
  %1085 = vmatpush1.msra.mxu0 0.0
  %1086 = vmatprep.subr.mxu0 0.0
  %1087 = vmatpush1.msra.mxu0 0.0
  %1088 = vmatprep.subr.mxu0 0.0
  %1089 = vmatpush1.msra.mxu0 0.0
  %1090 = vmatprep.subr.mxu0 0.0
  %1091 = vmatpush1.msra.mxu0 0.0
  %1092 = vmatprep.subr.mxu0 0.0
  %1093 = vmatpush1.msra.mxu0 0.0
  %1094 = vmatprep.subr.mxu0 0.0
  %1095 = vmatpush1.msra.mxu0 0.0
  %1096 = vmatprep.subr.mxu0 0.0
  %1097 = vmatpush1.msra.mxu0 0.0
  %1098 = vmatprep.subr.mxu0 0.0
  %1099 = vmatpush1.msra.mxu0 0.0
  %1100 = vmatprep.subr.mxu0 0.0
  %1101 = vmatpush1.msra.mxu0 0.0
  %1102 = vmatprep.subr.mxu0 0.0
  %1103 = vmatpush1.msra.mxu0 0.0
  %1104 = vmatprep.subr.mxu0 0.0
  %1105 = vmatpush1.msra.mxu0 0.0
  %1106 = vmatprep.subr.mxu0 0.0
  %1107 = vmatpush1.msra.mxu0 0.0
  %1108 = vmatprep.subr.mxu0 0.0
  %1109 = vmatpush1.msra.mxu0 0.0
  %1110 = vmatprep.subr.mxu0 0.0
  %1111 = vmatpush1.msra.mxu0 0.0
  %1112 = vmatprep.subr.mxu0 0.0
  %1113 = vmatpush1.msra.mxu0 0.0
  %1114 = vmatprep.subr.mxu0 0.0
  %1115 = vmatpush1.msra.mxu0 0.0
  %1116 = vmatprep.subr.mxu0 0.0
  %1117 = vmatpush1.msra.mxu0 0.0
  %1118 = vmatprep.subr.mxu0 0.0
  %1119 = vmatpush1.msra.mxu0 0.0
  %1120 = vmatprep.subr.mxu0 0.0
  %1121 = vmatpush1.msra.mxu0 0.0
  %1122 = vmatprep.subr.mxu0 0.0
  %1123 = vmatpush1.msra.mxu0 0.0
  %1124 = vmatprep.subr.mxu0 0.0
  %1125 = vmatpush1.msra.mxu0 0.0
  %1126 = vmatprep.subr.mxu0 0.0
  %1127 = vmatpush1.msra.mxu0 0.0
  %1128 = vmatprep.subr.mxu0 0.0
  %1129 = vmatpush1.msra.mxu0 0.0
  %1130 = vmatprep.subr.mxu0 0.0
  %1131 = vmatpush1.msra.mxu0 0.0
  %1132 = vmatprep.subr.mxu0 0.0
  %1133 = vmatpush1.msra.mxu0 0.0
  %1134 = vmatprep.mubr.f32.mxu0 0.0
  %1135 = vmatmul.mubr.f32.gmra.mrb[0].mxu0 %v1068
  %v1136 = vpop.f32.mrb[0].mxu0
  %v1137 = vadd.f32 0.0, %v1136
  %v1138 = vpop.f32.mrb[0].mxu0
  %1139 = vdwg.mxu0
  %1141 = vrot.lane.b32.xlu0 %v1137, 24
  %v1142 = vpop.permute.xlu0 %1141
  %vm1144 = vcmask 261312
  %1145 = vst.msk [vmem:[#allocation2] sm:$0xff] %vm1144, %v1142
  %v1147 = vsel %vm434, %v336, 0
  %v1150 = vsel %vm434, %v419, 0
  %v1153 = vsel %vm434, %v420, 0
  %1155 = vmatprep.subr.mxu0 0.0
  %1156 = vmatpush1.xpose.msra.mxu0 %v1150
  %1157 = vmatprep.subr.mxu0 0.0
  %1158 = vmatpush1.xpose.msra.mxu0 %v1153
  %1159 = vmatprep.subr.mxu0 0.0
  %1160 = vmatpush1.xpose.msra.mxu0 0.0
  %1161 = vmatprep.subr.mxu0 0.0
  %1162 = vmatpush1.xpose.msra.mxu0 0.0
  %1163 = vmatprep.subr.mxu0 0.0
  %1164 = vmatpush1.xpose.msra.mxu0 0.0
  %1165 = vmatprep.subr.mxu0 0.0
  %1166 = vmatpush1.xpose.msra.mxu0 0.0
  %1167 = vmatprep.subr.mxu0 0.0
  %1168 = vmatpush1.xpose.msra.mxu0 0.0
  %1169 = vmatprep.subr.mxu0 0.0
  %1170 = vmatpush1.xpose.msra.mxu0 0.0
  %1171 = vmatprep.subr.mxu0 0.0
  %1172 = vmatpush1.xpose.msra.mxu0 0.0
  %1173 = vmatprep.subr.mxu0 0.0
  %1174 = vmatpush1.xpose.msra.mxu0 0.0
  %1175 = vmatprep.subr.mxu0 0.0
  %1176 = vmatpush1.xpose.msra.mxu0 0.0
  %1177 = vmatprep.subr.mxu0 0.0
  %1178 = vmatpush1.xpose.msra.mxu0 0.0
  %1179 = vmatprep.subr.mxu0 0.0
  %1180 = vmatpush1.xpose.msra.mxu0 0.0
  %1181 = vmatprep.subr.mxu0 0.0
  %1182 = vmatpush1.xpose.msra.mxu0 0.0
  %1183 = vmatprep.subr.mxu0 0.0
  %1184 = vmatpush1.xpose.msra.mxu0 0.0
  %1185 = vmatprep.subr.mxu0 0.0
  %1186 = vmatpush1.xpose.msra.mxu0 0.0
  %1187 = vmatprep.subr.mxu0 0.0
  %1188 = vmatpush1.xpose.msra.mxu0 0.0
  %1189 = vmatprep.subr.mxu0 0.0
  %1190 = vmatpush1.xpose.msra.mxu0 0.0
  %1191 = vmatprep.subr.mxu0 0.0
  %1192 = vmatpush1.xpose.msra.mxu0 0.0
  %1193 = vmatprep.subr.mxu0 0.0
  %1194 = vmatpush1.xpose.msra.mxu0 0.0
  %1195 = vmatprep.subr.mxu0 0.0
  %1196 = vmatpush1.xpose.msra.mxu0 0.0
  %1197 = vmatprep.subr.mxu0 0.0
  %1198 = vmatpush1.xpose.msra.mxu0 0.0
  %1199 = vmatprep.subr.mxu0 0.0
  %1200 = vmatpush1.xpose.msra.mxu0 0.0
  %1201 = vmatprep.subr.mxu0 0.0
  %1202 = vmatpush1.xpose.msra.mxu0 0.0
  %1203 = vmatprep.subr.mxu0 0.0
  %1204 = vmatpush1.xpose.msra.mxu0 0.0
  %1205 = vmatprep.subr.mxu0 0.0
  %1206 = vmatpush1.xpose.msra.mxu0 0.0
  %1207 = vmatprep.subr.mxu0 0.0
  %1208 = vmatpush1.xpose.msra.mxu0 0.0
  %1209 = vmatprep.subr.mxu0 0.0
  %1210 = vmatpush1.xpose.msra.mxu0 0.0
  %1211 = vmatprep.subr.mxu0 0.0
  %1212 = vmatpush1.xpose.msra.mxu0 0.0
  %1213 = vmatprep.subr.mxu0 0.0
  %1214 = vmatpush1.xpose.msra.mxu0 0.0
  %1215 = vmatprep.subr.mxu0 0.0
  %1216 = vmatpush1.xpose.msra.mxu0 0.0
  %1217 = vmatprep.subr.mxu0 0.0
  %1218 = vmatpush1.xpose.msra.mxu0 0.0
  %1219 = vmatprep.mubr.f32.mxu0 0.0
  %1220 = vmatmul.mubr.f32.gmra.mrb[0].mxu0 %v1147
  %v1221 = vpop.f32.mrb[0].mxu0
  %v1222 = vadd.f32 0.0, %v1221
  %v1223 = vpop.f32.mrb[0].mxu0
  %1224 = vdwg.mxu0
  %v1225 = vmul.f32 %v1222, 0.35355338
  %v1226 = vsel %vm515, %v1225, -inf
  %1227 = vmax.xlane.f32.xlu0 %v1226
  %v1228 = vpop.xlane.xlu0 %1227
  %v1229 = vsub.f32 %v1225, %v1228
  %v1230 = vmul.f32 %v1229, 1.442695
  %v1231 = vpow.pop %v1230
  %v1232 = vsel %vm515, %v1231, 0.0
  %1233 = vadd.xlane.f32.xlu0 %v1232
  %v1234 = vpop.xlane.xlu0 %1233
  %v1235 = vrcp.pop %v1234
  %v1236 = vmul.f32 %v1231, %v1235
  %1239 = vrot.lane.b32.xlu0 %v432, 96
  %v1240 = vpop.permute.xlu0 %1239
  %1241 = vrot.lane.b32.xlu0 %v433, 96
  %v1242 = vpop.permute.xlu0 %1241
  %v1246 = vsel %vm515, %v1236, 0
  %1248 = vmatprep.subr.mxu0 0.0
  %1249 = vmatpush1.msra.mxu0 %v1240
  %1250 = vmatprep.subr.mxu0 0.0
  %1251 = vmatpush1.msra.mxu0 %v1242
  %1252 = vmatprep.subr.mxu0 0.0
  %1253 = vmatpush1.msra.mxu0 0.0
  %1254 = vmatprep.subr.mxu0 0.0
  %1255 = vmatpush1.msra.mxu0 0.0
  %1256 = vmatprep.subr.mxu0 0.0
  %1257 = vmatpush1.msra.mxu0 0.0
  %1258 = vmatprep.subr.mxu0 0.0
  %1259 = vmatpush1.msra.mxu0 0.0
  %1260 = vmatprep.subr.mxu0 0.0
  %1261 = vmatpush1.msra.mxu0 0.0
  %1262 = vmatprep.subr.mxu0 0.0
  %1263 = vmatpush1.msra.mxu0 0.0
  %1264 = vmatprep.subr.mxu0 0.0
  %1265 = vmatpush1.msra.mxu0 0.0
  %1266 = vmatprep.subr.mxu0 0.0
  %1267 = vmatpush1.msra.mxu0 0.0
  %1268 = vmatprep.subr.mxu0 0.0
  %1269 = vmatpush1.msra.mxu0 0.0
  %1270 = vmatprep.subr.mxu0 0.0
  %1271 = vmatpush1.msra.mxu0 0.0
  %1272 = vmatprep.subr.mxu0 0.0
  %1273 = vmatpush1.msra.mxu0 0.0
  %1274 = vmatprep.subr.mxu0 0.0
  %1275 = vmatpush1.msra.mxu0 0.0
  %1276 = vmatprep.subr.mxu0 0.0
  %1277 = vmatpush1.msra.mxu0 0.0
  %1278 = vmatprep.subr.mxu0 0.0
  %1279 = vmatpush1.msra.mxu0 0.0
  %1280 = vmatprep.subr.mxu0 0.0
  %1281 = vmatpush1.msra.mxu0 0.0
  %1282 = vmatprep.subr.mxu0 0.0
  %1283 = vmatpush1.msra.mxu0 0.0
  %1284 = vmatprep.subr.mxu0 0.0
  %1285 = vmatpush1.msra.mxu0 0.0
  %1286 = vmatprep.subr.mxu0 0.0
  %1287 = vmatpush1.msra.mxu0 0.0
  %1288 = vmatprep.subr.mxu0 0.0
  %1289 = vmatpush1.msra.mxu0 0.0
  %1290 = vmatprep.subr.mxu0 0.0
  %1291 = vmatpush1.msra.mxu0 0.0
  %1292 = vmatprep.subr.mxu0 0.0
  %1293 = vmatpush1.msra.mxu0 0.0
  %1294 = vmatprep.subr.mxu0 0.0
  %1295 = vmatpush1.msra.mxu0 0.0
  %1296 = vmatprep.subr.mxu0 0.0
  %1297 = vmatpush1.msra.mxu0 0.0
  %1298 = vmatprep.subr.mxu0 0.0
  %1299 = vmatpush1.msra.mxu0 0.0
  %1300 = vmatprep.subr.mxu0 0.0
  %1301 = vmatpush1.msra.mxu0 0.0
  %1302 = vmatprep.subr.mxu0 0.0
  %1303 = vmatpush1.msra.mxu0 0.0
  %1304 = vmatprep.subr.mxu0 0.0
  %1305 = vmatpush1.msra.mxu0 0.0
  %1306 = vmatprep.subr.mxu0 0.0
  %1307 = vmatpush1.msra.mxu0 0.0
  %1308 = vmatprep.subr.mxu0 0.0
  %1309 = vmatpush1.msra.mxu0 0.0
  %1310 = vmatprep.subr.mxu0 0.0
  %1311 = vmatpush1.msra.mxu0 0.0
  %1312 = vmatprep.mubr.f32.mxu0 0.0
  %1313 = vmatmul.mubr.f32.gmra.mrb[0].mxu0 %v1246
  %v1314 = vpop.f32.mrb[0].mxu0
  %v1315 = vadd.f32 0.0, %v1314
  %v1316 = vpop.f32.mrb[0].mxu0
  %1317 = vdwg.mxu0
  %1318 = vst.msk [vmem:[#allocation2 + $0x8] sm:$0xff] %vm434, %v1315
  %1319 = vrot.lane.b32.xlu0 %v336, 120
  %v1320 = vpop.permute.xlu0 %1319
  %1321 = vrot.lane.b32.xlu0 %v419, 120
  %v1322 = vpop.permute.xlu0 %1321
  %1323 = vrot.lane.b32.xlu0 %v420, 120
  %v1324 = vpop.permute.xlu0 %1323
  %v1325 = vsel %vm434, %v1320, 0
  %v1327 = vsel %vm434, %v1322, 0
  %v1329 = vsel %vm434, %v1324, 0
  %1331 = vmatprep.subr.mxu0 0.0
  %1332 = vmatpush1.xpose.msra.mxu0 %v1327
  %1333 = vmatprep.subr.mxu0 0.0
  %1334 = vmatpush1.xpose.msra.mxu0 %v1329
  %1335 = vmatprep.subr.mxu0 0.0
  %1336 = vmatpush1.xpose.msra.mxu0 0.0
  %1337 = vmatprep.subr.mxu0 0.0
  %1338 = vmatpush1.xpose.msra.mxu0 0.0
  %1339 = vmatprep.subr.mxu0 0.0
  %1340 = vmatpush1.xpose.msra.mxu0 0.0
  %1341 = vmatprep.subr.mxu0 0.0
  %1342 = vmatpush1.xpose.msra.mxu0 0.0
  %1343 = vmatprep.subr.mxu0 0.0
  %1344 = vmatpush1.xpose.msra.mxu0 0.0
  %1345 = vmatprep.subr.mxu0 0.0
  %1346 = vmatpush1.xpose.msra.mxu0 0.0
  %1347 = vmatprep.subr.mxu0 0.0
  %1348 = vmatpush1.xpose.msra.mxu0 0.0
  %1349 = vmatprep.subr.mxu0 0.0
  %1350 = vmatpush1.xpose.msra.mxu0 0.0
  %1351 = vmatprep.subr.mxu0 0.0
  %1352 = vmatpush1.xpose.msra.mxu0 0.0
  %1353 = vmatprep.subr.mxu0 0.0
  %1354 = vmatpush1.xpose.msra.mxu0 0.0
  %1355 = vmatprep.subr.mxu0 0.0
  %1356 = vmatpush1.xpose.msra.mxu0 0.0
  %1357 = vmatprep.subr.mxu0 0.0
  %1358 = vmatpush1.xpose.msra.mxu0 0.0
  %1359 = vmatprep.subr.mxu0 0.0
  %1360 = vmatpush1.xpose.msra.mxu0 0.0
  %1361 = vmatprep.subr.mxu0 0.0
  %1362 = vmatpush1.xpose.msra.mxu0 0.0
  %1363 = vmatprep.subr.mxu0 0.0
  %1364 = vmatpush1.xpose.msra.mxu0 0.0
  %1365 = vmatprep.subr.mxu0 0.0
  %1366 = vmatpush1.xpose.msra.mxu0 0.0
  %1367 = vmatprep.subr.mxu0 0.0
  %1368 = vmatpush1.xpose.msra.mxu0 0.0
  %1369 = vmatprep.subr.mxu0 0.0
  %1370 = vmatpush1.xpose.msra.mxu0 0.0
  %1371 = vmatprep.subr.mxu0 0.0
  %1372 = vmatpush1.xpose.msra.mxu0 0.0
  %1373 = vmatprep.subr.mxu0 0.0
  %1374 = vmatpush1.xpose.msra.mxu0 0.0
  %1375 = vmatprep.subr.mxu0 0.0
  %1376 = vmatpush1.xpose.msra.mxu0 0.0
  %1377 = vmatprep.subr.mxu0 0.0
  %1378 = vmatpush1.xpose.msra.mxu0 0.0
  %1379 = vmatprep.subr.mxu0 0.0
  %1380 = vmatpush1.xpose.msra.mxu0 0.0
  %1381 = vmatprep.subr.mxu0 0.0
  %1382 = vmatpush1.xpose.msra.mxu0 0.0
  %1383 = vmatprep.subr.mxu0 0.0
  %1384 = vmatpush1.xpose.msra.mxu0 0.0
  %1385 = vmatprep.subr.mxu0 0.0
  %1386 = vmatpush1.xpose.msra.mxu0 0.0
  %1387 = vmatprep.subr.mxu0 0.0
  %1388 = vmatpush1.xpose.msra.mxu0 0.0
  %1389 = vmatprep.subr.mxu0 0.0
  %1390 = vmatpush1.xpose.msra.mxu0 0.0
  %1391 = vmatprep.subr.mxu0 0.0
  %1392 = vmatpush1.xpose.msra.mxu0 0.0
  %1393 = vmatprep.subr.mxu0 0.0
  %1394 = vmatpush1.xpose.msra.mxu0 0.0
  %1395 = vmatprep.mubr.f32.mxu0 0.0
  %1396 = vmatmul.mubr.f32.gmra.mrb[0].mxu0 %v1325
  %v1397 = vpop.f32.mrb[0].mxu0
  %v1398 = vadd.f32 0.0, %v1397
  %v1399 = vpop.f32.mrb[0].mxu0
  %1400 = vdwg.mxu0
  %v1401 = vmul.f32 %v1398, 0.35355338
  %v1402 = vsel %vm515, %v1401, -inf
  %1403 = vmax.xlane.f32.xlu0 %v1402
  %v1404 = vpop.xlane.xlu0 %1403
  %v1405 = vsub.f32 %v1401, %v1404
  %v1406 = vmul.f32 %v1405, 1.442695
  %v1407 = vpow.pop %v1406
  %v1408 = vsel %vm515, %v1407, 0.0
  %1409 = vadd.xlane.f32.xlu0 %v1408
  %v1410 = vpop.xlane.xlu0 %1409
  %v1411 = vrcp.pop %v1410
  %v1412 = vmul.f32 %v1407, %v1411
  %1413 = vrot.lane.b32.xlu0 %v432, 88
  %v1414 = vpop.permute.xlu0 %1413
  %1415 = vrot.lane.b32.xlu0 %v433, 88
  %v1416 = vpop.permute.xlu0 %1415
  %v1420 = vsel %vm515, %v1412, 0
  %1422 = vmatprep.subr.mxu0 0.0
  %1423 = vmatpush1.msra.mxu0 %v1414
  %1424 = vmatprep.subr.mxu0 0.0
  %1425 = vmatpush1.msra.mxu0 %v1416
  %1426 = vmatprep.subr.mxu0 0.0
  %1427 = vmatpush1.msra.mxu0 0.0
  %1428 = vmatprep.subr.mxu0 0.0
  %1429 = vmatpush1.msra.mxu0 0.0
  %1430 = vmatprep.subr.mxu0 0.0
  %1431 = vmatpush1.msra.mxu0 0.0
  %1432 = vmatprep.subr.mxu0 0.0
  %1433 = vmatpush1.msra.mxu0 0.0
  %1434 = vmatprep.subr.mxu0 0.0
  %1435 = vmatpush1.msra.mxu0 0.0
  %1436 = vmatprep.subr.mxu0 0.0
  %1437 = vmatpush1.msra.mxu0 0.0
  %1438 = vmatprep.subr.mxu0 0.0
  %1439 = vmatpush1.msra.mxu0 0.0
  %1440 = vmatprep.subr.mxu0 0.0
  %1441 = vmatpush1.msra.mxu0 0.0
  %1442 = vmatprep.subr.mxu0 0.0
  %1443 = vmatpush1.msra.mxu0 0.0
  %1444 = vmatprep.subr.mxu0 0.0
  %1445 = vmatpush1.msra.mxu0 0.0
  %1446 = vmatprep.subr.mxu0 0.0
  %1447 = vmatpush1.msra.mxu0 0.0
  %1448 = vmatprep.subr.mxu0 0.0
  %1449 = vmatpush1.msra.mxu0 0.0
  %1450 = vmatprep.subr.mxu0 0.0
  %1451 = vmatpush1.msra.mxu0 0.0
  %1452 = vmatprep.subr.mxu0 0.0
  %1453 = vmatpush1.msra.mxu0 0.0
  %1454 = vmatprep.subr.mxu0 0.0
  %1455 = vmatpush1.msra.mxu0 0.0
  %1456 = vmatprep.subr.mxu0 0.0
  %1457 = vmatpush1.msra.mxu0 0.0
  %1458 = vmatprep.subr.mxu0 0.0
  %1459 = vmatpush1.msra.mxu0 0.0
  %1460 = vmatprep.subr.mxu0 0.0
  %1461 = vmatpush1.msra.mxu0 0.0
  %1462 = vmatprep.subr.mxu0 0.0
  %1463 = vmatpush1.msra.mxu0 0.0
  %1464 = vmatprep.subr.mxu0 0.0
  %1465 = vmatpush1.msra.mxu0 0.0
  %1466 = vmatprep.subr.mxu0 0.0
  %1467 = vmatpush1.msra.mxu0 0.0
  %1468 = vmatprep.subr.mxu0 0.0
  %1469 = vmatpush1.msra.mxu0 0.0
  %1470 = vmatprep.subr.mxu0 0.0
  %1471 = vmatpush1.msra.mxu0 0.0
  %1472 = vmatprep.subr.mxu0 0.0
  %1473 = vmatpush1.msra.mxu0 0.0
  %1474 = vmatprep.subr.mxu0 0.0
  %1475 = vmatpush1.msra.mxu0 0.0
  %1476 = vmatprep.subr.mxu0 0.0
  %1477 = vmatpush1.msra.mxu0 0.0
  %1478 = vmatprep.subr.mxu0 0.0
  %1479 = vmatpush1.msra.mxu0 0.0
  %1480 = vmatprep.subr.mxu0 0.0
  %1481 = vmatpush1.msra.mxu0 0.0
  %1482 = vmatprep.subr.mxu0 0.0
  %1483 = vmatpush1.msra.mxu0 0.0
  %1484 = vmatprep.subr.mxu0 0.0
  %1485 = vmatpush1.msra.mxu0 0.0
  %1486 = vmatprep.mubr.f32.mxu0 0.0
  %1487 = vmatmul.mubr.f32.gmra.mrb[0].mxu0 %v1420
  %v1488 = vpop.f32.mrb[0].mxu0
  %v1489 = vadd.f32 0.0, %v1488
  %v1490 = vpop.f32.mrb[0].mxu0
  %1491 = vdwg.mxu0
  %1493 = vrot.lane.b32.xlu0 %v1489, 8
  %v1494 = vpop.permute.xlu0 %1493
  %1496 = vst.msk [vmem:[#allocation2 + $0x8] sm:$0xff] %vm786, %v1494
  %1497 = vrot.lane.b32.xlu0 %v336, 112
  %v1498 = vpop.permute.xlu0 %1497
  %1499 = vrot.lane.b32.xlu0 %v419, 112
  %v1500 = vpop.permute.xlu0 %1499
  %1501 = vrot.lane.b32.xlu0 %v420, 112
  %v1502 = vpop.permute.xlu0 %1501
  %v1503 = vsel %vm434, %v1498, 0
  %v1505 = vsel %vm434, %v1500, 0
  %v1507 = vsel %vm434, %v1502, 0
  %1509 = vmatprep.subr.mxu0 0.0
  %1510 = vmatpush1.xpose.msra.mxu0 %v1505
  %1511 = vmatprep.subr.mxu0 0.0
  %1512 = vmatpush1.xpose.msra.mxu0 %v1507
  %1513 = vmatprep.subr.mxu0 0.0
  %1514 = vmatpush1.xpose.msra.mxu0 0.0
  %1515 = vmatprep.subr.mxu0 0.0
  %1516 = vmatpush1.xpose.msra.mxu0 0.0
  %1517 = vmatprep.subr.mxu0 0.0
  %1518 = vmatpush1.xpose.msra.mxu0 0.0
  %1519 = vmatprep.subr.mxu0 0.0
  %1520 = vmatpush1.xpose.msra.mxu0 0.0
  %1521 = vmatprep.subr.mxu0 0.0
  %1522 = vmatpush1.xpose.msra.mxu0 0.0
  %1523 = vmatprep.subr.mxu0 0.0
  %1524 = vmatpush1.xpose.msra.mxu0 0.0
  %1525 = vmatprep.subr.mxu0 0.0
  %1526 = vmatpush1.xpose.msra.mxu0 0.0
  %1527 = vmatprep.subr.mxu0 0.0
  %1528 = vmatpush1.xpose.msra.mxu0 0.0
  %1529 = vmatprep.subr.mxu0 0.0
  %1530 = vmatpush1.xpose.msra.mxu0 0.0
  %1531 = vmatprep.subr.mxu0 0.0
  %1532 = vmatpush1.xpose.msra.mxu0 0.0
  %1533 = vmatprep.subr.mxu0 0.0
  %1534 = vmatpush1.xpose.msra.mxu0 0.0
  %1535 = vmatprep.subr.mxu0 0.0
  %1536 = vmatpush1.xpose.msra.mxu0 0.0
  %1537 = vmatprep.subr.mxu0 0.0
  %1538 = vmatpush1.xpose.msra.mxu0 0.0
  %1539 = vmatprep.subr.mxu0 0.0
  %1540 = vmatpush1.xpose.msra.mxu0 0.0
  %1541 = vmatprep.subr.mxu0 0.0
  %1542 = vmatpush1.xpose.msra.mxu0 0.0
  %1543 = vmatprep.subr.mxu0 0.0
  %1544 = vmatpush1.xpose.msra.mxu0 0.0
  %1545 = vmatprep.subr.mxu0 0.0
  %1546 = vmatpush1.xpose.msra.mxu0 0.0
  %1547 = vmatprep.subr.mxu0 0.0
  %1548 = vmatpush1.xpose.msra.mxu0 0.0
  %1549 = vmatprep.subr.mxu0 0.0
  %1550 = vmatpush1.xpose.msra.mxu0 0.0
  %1551 = vmatprep.subr.mxu0 0.0
  %1552 = vmatpush1.xpose.msra.mxu0 0.0
  %1553 = vmatprep.subr.mxu0 0.0
  %1554 = vmatpush1.xpose.msra.mxu0 0.0
  %1555 = vmatprep.subr.mxu0 0.0
  %1556 = vmatpush1.xpose.msra.mxu0 0.0
  %1557 = vmatprep.subr.mxu0 0.0
  %1558 = vmatpush1.xpose.msra.mxu0 0.0
  %1559 = vmatprep.subr.mxu0 0.0
  %1560 = vmatpush1.xpose.msra.mxu0 0.0
  %1561 = vmatprep.subr.mxu0 0.0
  %1562 = vmatpush1.xpose.msra.mxu0 0.0
  %1563 = vmatprep.subr.mxu0 0.0
  %1564 = vmatpush1.xpose.msra.mxu0 0.0
  %1565 = vmatprep.subr.mxu0 0.0
  %1566 = vmatpush1.xpose.msra.mxu0 0.0
  %1567 = vmatprep.subr.mxu0 0.0
  %1568 = vmatpush1.xpose.msra.mxu0 0.0
  %1569 = vmatprep.subr.mxu0 0.0
  %1570 = vmatpush1.xpose.msra.mxu0 0.0
  %1571 = vmatprep.subr.mxu0 0.0
  %1572 = vmatpush1.xpose.msra.mxu0 0.0
  %1573 = vmatprep.mubr.f32.mxu0 0.0
  %1574 = vmatmul.mubr.f32.gmra.mrb[0].mxu0 %v1503
  %v1575 = vpop.f32.mrb[0].mxu0
  %v1576 = vadd.f32 0.0, %v1575
  %v1577 = vpop.f32.mrb[0].mxu0
  %1578 = vdwg.mxu0
  %v1579 = vmul.f32 %v1576, 0.35355338
  %v1580 = vsel %vm515, %v1579, -inf
  %1581 = vmax.xlane.f32.xlu0 %v1580
  %v1582 = vpop.xlane.xlu0 %1581
  %v1583 = vsub.f32 %v1579, %v1582
  %v1584 = vmul.f32 %v1583, 1.442695
  %v1585 = vpow.pop %v1584
  %v1586 = vsel %vm515, %v1585, 0.0
  %1587 = vadd.xlane.f32.xlu0 %v1586
  %v1588 = vpop.xlane.xlu0 %1587
  %v1589 = vrcp.pop %v1588
  %v1590 = vmul.f32 %v1585, %v1589
  %1591 = vrot.lane.b32.xlu0 %v432, 80
  %v1592 = vpop.permute.xlu0 %1591
  %1593 = vrot.lane.b32.xlu0 %v433, 80
  %v1594 = vpop.permute.xlu0 %1593
  %v1598 = vsel %vm515, %v1590, 0
  %1600 = vmatprep.subr.mxu0 0.0
  %1601 = vmatpush1.msra.mxu0 %v1592
  %1602 = vmatprep.subr.mxu0 0.0
  %1603 = vmatpush1.msra.mxu0 %v1594
  %1604 = vmatprep.subr.mxu0 0.0
  %1605 = vmatpush1.msra.mxu0 0.0
  %1606 = vmatprep.subr.mxu0 0.0
  %1607 = vmatpush1.msra.mxu0 0.0
  %1608 = vmatprep.subr.mxu0 0.0
  %1609 = vmatpush1.msra.mxu0 0.0
  %1610 = vmatprep.subr.mxu0 0.0
  %1611 = vmatpush1.msra.mxu0 0.0
  %1612 = vmatprep.subr.mxu0 0.0
  %1613 = vmatpush1.msra.mxu0 0.0
  %1614 = vmatprep.subr.mxu0 0.0
  %1615 = vmatpush1.msra.mxu0 0.0
  %1616 = vmatprep.subr.mxu0 0.0
  %1617 = vmatpush1.msra.mxu0 0.0
  %1618 = vmatprep.subr.mxu0 0.0
  %1619 = vmatpush1.msra.mxu0 0.0
  %1620 = vmatprep.subr.mxu0 0.0
  %1621 = vmatpush1.msra.mxu0 0.0
  %1622 = vmatprep.subr.mxu0 0.0
  %1623 = vmatpush1.msra.mxu0 0.0
  %1624 = vmatprep.subr.mxu0 0.0
  %1625 = vmatpush1.msra.mxu0 0.0
  %1626 = vmatprep.subr.mxu0 0.0
  %1627 = vmatpush1.msra.mxu0 0.0
  %1628 = vmatprep.subr.mxu0 0.0
  %1629 = vmatpush1.msra.mxu0 0.0
  %1630 = vmatprep.subr.mxu0 0.0
  %1631 = vmatpush1.msra.mxu0 0.0
  %1632 = vmatprep.subr.mxu0 0.0
  %1633 = vmatpush1.msra.mxu0 0.0
  %1634 = vmatprep.subr.mxu0 0.0
  %1635 = vmatpush1.msra.mxu0 0.0
  %1636 = vmatprep.subr.mxu0 0.0
  %1637 = vmatpush1.msra.mxu0 0.0
  %1638 = vmatprep.subr.mxu0 0.0
  %1639 = vmatpush1.msra.mxu0 0.0
  %1640 = vmatprep.subr.mxu0 0.0
  %1641 = vmatpush1.msra.mxu0 0.0
  %1642 = vmatprep.subr.mxu0 0.0
  %1643 = vmatpush1.msra.mxu0 0.0
  %1644 = vmatprep.subr.mxu0 0.0
  %1645 = vmatpush1.msra.mxu0 0.0
  %1646 = vmatprep.subr.mxu0 0.0
  %1647 = vmatpush1.msra.mxu0 0.0
  %1648 = vmatprep.subr.mxu0 0.0
  %1649 = vmatpush1.msra.mxu0 0.0
  %1650 = vmatprep.subr.mxu0 0.0
  %1651 = vmatpush1.msra.mxu0 0.0
  %1652 = vmatprep.subr.mxu0 0.0
  %1653 = vmatpush1.msra.mxu0 0.0
  %1654 = vmatprep.subr.mxu0 0.0
  %1655 = vmatpush1.msra.mxu0 0.0
  %1656 = vmatprep.subr.mxu0 0.0
  %1657 = vmatpush1.msra.mxu0 0.0
  %1658 = vmatprep.subr.mxu0 0.0
  %1659 = vmatpush1.msra.mxu0 0.0
  %1660 = vmatprep.subr.mxu0 0.0
  %1661 = vmatpush1.msra.mxu0 0.0
  %1662 = vmatprep.subr.mxu0 0.0
  %1663 = vmatpush1.msra.mxu0 0.0
  %1664 = vmatprep.mubr.f32.mxu0 0.0
  %1665 = vmatmul.mubr.f32.gmra.mrb[0].mxu0 %v1598
  %v1666 = vpop.f32.mrb[0].mxu0
  %v1667 = vadd.f32 0.0, %v1666
  %v1668 = vpop.f32.mrb[0].mxu0
  %1669 = vdwg.mxu0
  %1671 = vrot.lane.b32.xlu0 %v1667, 16
  %v1672 = vpop.permute.xlu0 %1671
  %1674 = vst.msk [vmem:[#allocation2 + $0x8] sm:$0xff] %vm965, %v1672
  %1675 = vrot.lane.b32.xlu0 %v336, 104
  %v1676 = vpop.permute.xlu0 %1675
  %1677 = vrot.lane.b32.xlu0 %v419, 104
  %v1678 = vpop.permute.xlu0 %1677
  %1679 = vrot.lane.b32.xlu0 %v420, 104
  %v1680 = vpop.permute.xlu0 %1679
  %v1681 = vsel %vm434, %v1676, 0
  %v1683 = vsel %vm434, %v1678, 0
  %v1685 = vsel %vm434, %v1680, 0
  %1687 = vmatprep.subr.mxu0 0.0
  %1688 = vmatpush1.xpose.msra.mxu0 %v1683
  %1689 = vmatprep.subr.mxu0 0.0
  %1690 = vmatpush1.xpose.msra.mxu0 %v1685
  %1691 = vmatprep.subr.mxu0 0.0
  %1692 = vmatpush1.xpose.msra.mxu0 0.0
  %1693 = vmatprep.subr.mxu0 0.0
  %1694 = vmatpush1.xpose.msra.mxu0 0.0
  %1695 = vmatprep.subr.mxu0 0.0
  %1696 = vmatpush1.xpose.msra.mxu0 0.0
  %1697 = vmatprep.subr.mxu0 0.0
  %1698 = vmatpush1.xpose.msra.mxu0 0.0
  %1699 = vmatprep.subr.mxu0 0.0
  %1700 = vmatpush1.xpose.msra.mxu0 0.0
  %1701 = vmatprep.subr.mxu0 0.0
  %1702 = vmatpush1.xpose.msra.mxu0 0.0
  %1703 = vmatprep.subr.mxu0 0.0
  %1704 = vmatpush1.xpose.msra.mxu0 0.0
  %1705 = vmatprep.subr.mxu0 0.0
  %1706 = vmatpush1.xpose.msra.mxu0 0.0
  %1707 = vmatprep.subr.mxu0 0.0
  %1708 = vmatpush1.xpose.msra.mxu0 0.0
  %1709 = vmatprep.subr.mxu0 0.0
  %1710 = vmatpush1.xpose.msra.mxu0 0.0
  %1711 = vmatprep.subr.mxu0 0.0
  %1712 = vmatpush1.xpose.msra.mxu0 0.0
  %1713 = vmatprep.subr.mxu0 0.0
  %1714 = vmatpush1.xpose.msra.mxu0 0.0
  %1715 = vmatprep.subr.mxu0 0.0
  %1716 = vmatpush1.xpose.msra.mxu0 0.0
  %1717 = vmatprep.subr.mxu0 0.0
  %1718 = vmatpush1.xpose.msra.mxu0 0.0
  %1719 = vmatprep.subr.mxu0 0.0
  %1720 = vmatpush1.xpose.msra.mxu0 0.0
  %1721 = vmatprep.subr.mxu0 0.0
  %1722 = vmatpush1.xpose.msra.mxu0 0.0
  %1723 = vmatprep.subr.mxu0 0.0
  %1724 = vmatpush1.xpose.msra.mxu0 0.0
  %1725 = vmatprep.subr.mxu0 0.0
  %1726 = vmatpush1.xpose.msra.mxu0 0.0
  %1727 = vmatprep.subr.mxu0 0.0
  %1728 = vmatpush1.xpose.msra.mxu0 0.0
  %1729 = vmatprep.subr.mxu0 0.0
  %1730 = vmatpush1.xpose.msra.mxu0 0.0
  %1731 = vmatprep.subr.mxu0 0.0
  %1732 = vmatpush1.xpose.msra.mxu0 0.0
  %1733 = vmatprep.subr.mxu0 0.0
  %1734 = vmatpush1.xpose.msra.mxu0 0.0
  %1735 = vmatprep.subr.mxu0 0.0
  %1736 = vmatpush1.xpose.msra.mxu0 0.0
  %1737 = vmatprep.subr.mxu0 0.0
  %1738 = vmatpush1.xpose.msra.mxu0 0.0
  %1739 = vmatprep.subr.mxu0 0.0
  %1740 = vmatpush1.xpose.msra.mxu0 0.0
  %1741 = vmatprep.subr.mxu0 0.0
  %1742 = vmatpush1.xpose.msra.mxu0 0.0
  %1743 = vmatprep.subr.mxu0 0.0
  %1744 = vmatpush1.xpose.msra.mxu0 0.0
  %1745 = vmatprep.subr.mxu0 0.0
  %1746 = vmatpush1.xpose.msra.mxu0 0.0
  %1747 = vmatprep.subr.mxu0 0.0
  %1748 = vmatpush1.xpose.msra.mxu0 0.0
  %1749 = vmatprep.subr.mxu0 0.0
  %1750 = vmatpush1.xpose.msra.mxu0 0.0
  %1751 = vmatprep.mubr.f32.mxu0 0.0
  %1752 = vmatmul.mubr.f32.gmra.mrb[0].mxu0 %v1681
  %v1753 = vpop.f32.mrb[0].mxu0
  %v1754 = vadd.f32 0.0, %v1753
  %v1755 = vpop.f32.mrb[0].mxu0
  %1756 = vdwg.mxu0
  %v1757 = vmul.f32 %v1754, 0.35355338
  %v1758 = vsel %vm515, %v1757, -inf
  %1759 = vmax.xlane.f32.xlu0 %v1758
  %v1760 = vpop.xlane.xlu0 %1759
  %v1761 = vsub.f32 %v1757, %v1760
  %v1762 = vmul.f32 %v1761, 1.442695
  %v1763 = vpow.pop %v1762
  %v1764 = vsel %vm515, %v1763, 0.0
  %1765 = vadd.xlane.f32.xlu0 %v1764
  %v1766 = vpop.xlane.xlu0 %1765
  %v1767 = vrcp.pop %v1766
  %v1768 = vmul.f32 %v1763, %v1767
  %1769 = vrot.lane.b32.xlu0 %v432, 72
  %v1770 = vpop.permute.xlu0 %1769
  %1771 = vrot.lane.b32.xlu0 %v433, 72
  %v1772 = vpop.permute.xlu0 %1771
  %v1776 = vsel %vm515, %v1768, 0
  %1778 = vmatprep.subr.mxu0 0.0
  %1779 = vmatpush1.msra.mxu0 %v1770
  %1780 = vmatprep.subr.mxu0 0.0
  %1781 = vmatpush1.msra.mxu0 %v1772
  %1782 = vmatprep.subr.mxu0 0.0
  %1783 = vmatpush1.msra.mxu0 0.0
  %1784 = vmatprep.subr.mxu0 0.0
  %1785 = vmatpush1.msra.mxu0 0.0
  %1786 = vmatprep.subr.mxu0 0.0
  %1787 = vmatpush1.msra.mxu0 0.0
  %1788 = vmatprep.subr.mxu0 0.0
  %1789 = vmatpush1.msra.mxu0 0.0
  %1790 = vmatprep.subr.mxu0 0.0
  %1791 = vmatpush1.msra.mxu0 0.0
  %1792 = vmatprep.subr.mxu0 0.0
  %1793 = vmatpush1.msra.mxu0 0.0
  %1794 = vmatprep.subr.mxu0 0.0
  %1795 = vmatpush1.msra.mxu0 0.0
  %1796 = vmatprep.subr.mxu0 0.0
  %1797 = vmatpush1.msra.mxu0 0.0
  %1798 = vmatprep.subr.mxu0 0.0
  %1799 = vmatpush1.msra.mxu0 0.0
  %1800 = vmatprep.subr.mxu0 0.0
  %1801 = vmatpush1.msra.mxu0 0.0
  %1802 = vmatprep.subr.mxu0 0.0
  %1803 = vmatpush1.msra.mxu0 0.0
  %1804 = vmatprep.subr.mxu0 0.0
  %1805 = vmatpush1.msra.mxu0 0.0
  %1806 = vmatprep.subr.mxu0 0.0
  %1807 = vmatpush1.msra.mxu0 0.0
  %1808 = vmatprep.subr.mxu0 0.0
  %1809 = vmatpush1.msra.mxu0 0.0
  %1810 = vmatprep.subr.mxu0 0.0
  %1811 = vmatpush1.msra.mxu0 0.0
  %1812 = vmatprep.subr.mxu0 0.0
  %1813 = vmatpush1.msra.mxu0 0.0
  %1814 = vmatprep.subr.mxu0 0.0
  %1815 = vmatpush1.msra.mxu0 0.0
  %1816 = vmatprep.subr.mxu0 0.0
  %1817 = vmatpush1.msra.mxu0 0.0
  %1818 = vmatprep.subr.mxu0 0.0
  %1819 = vmatpush1.msra.mxu0 0.0
  %1820 = vmatprep.subr.mxu0 0.0
  %1821 = vmatpush1.msra.mxu0 0.0
  %1822 = vmatprep.subr.mxu0 0.0
  %1823 = vmatpush1.msra.mxu0 0.0
  %1824 = vmatprep.subr.mxu0 0.0
  %1825 = vmatpush1.msra.mxu0 0.0
  %1826 = vmatprep.subr.mxu0 0.0
  %1827 = vmatpush1.msra.mxu0 0.0
  %1828 = vmatprep.subr.mxu0 0.0
  %1829 = vmatpush1.msra.mxu0 0.0
  %1830 = vmatprep.subr.mxu0 0.0
  %1831 = vmatpush1.msra.mxu0 0.0
  %1832 = vmatprep.subr.mxu0 0.0
  %1833 = vmatpush1.msra.mxu0 0.0
  %1834 = vmatprep.subr.mxu0 0.0
  %1835 = vmatpush1.msra.mxu0 0.0
  %1836 = vmatprep.subr.mxu0 0.0
  %1837 = vmatpush1.msra.mxu0 0.0
  %1838 = vmatprep.subr.mxu0 0.0
  %1839 = vmatpush1.msra.mxu0 0.0
  %1840 = vmatprep.subr.mxu0 0.0
  %1841 = vmatpush1.msra.mxu0 0.0
  %1842 = vmatprep.mubr.f32.mxu0 0.0
  %1843 = vmatmul.mubr.f32.gmra.mrb[0].mxu0 %v1776
  %v1844 = vpop.f32.mrb[0].mxu0
  %v1845 = vadd.f32 0.0, %v1844
  %v1846 = vpop.f32.mrb[0].mxu0
  %1847 = vdwg.mxu0
  %1849 = vrot.lane.b32.xlu0 %v1845, 24
  %v1850 = vpop.permute.xlu0 %1849
  %1852 = vst.msk [vmem:[#allocation2 + $0x8] sm:$0xff] %vm1144, %v1850
  %v1853 = vld [vmem:[#allocation2] sm:$0xff]
  %v1854 = vld [vmem:[#allocation2 + $0x8] sm:$0xff]
  %v1855 = vld [vmem:[%s8] sm:$0xf]
  %v1856 = vld [vmem:[%s8 + $0x4] sm:$0xf]
  %v1857 = vld [vmem:[%s8 + $0x8] sm:$0xf]
  %v1858 = vld [vmem:[%s8 + $0xc] sm:$0xf]
  %v1859 = vpack.c.bf16 %v1854, %v1853
  %v1864 = vunpack.c.l.b16 %v1855
  %v1865 = vunpack.c.l.b16 %v1856
  %v1866 = vunpack.c.l.b16 %v1857
  %v1867 = vunpack.c.l.b16 %v1858
  %v1868 = vpack.c.b16 %v1865, %v1864
  %v1869 = vpack.c.b16 %v1867, %v1866
  %v1873 = vsel %vm163, %v1859, 0
  %1875 = vmatprep.subr.bf16.mxu0 0
  %1876 = vmatpush1.bf16.msra.mxu0 %v1868
  %1877 = vmatprep.subr.bf16.mxu0 0
  %1878 = vmatpush1.bf16.msra.mxu0 %v1869
  %1879 = vmatprep.subr.bf16.mxu0 0
  %1880 = vmatpush1.bf16.msra.mxu0 0
  %1881 = vmatprep.subr.bf16.mxu0 0
  %1882 = vmatpush1.bf16.msra.mxu0 0
  %1883 = vmatprep.subr.bf16.mxu0 0
  %1884 = vmatpush1.bf16.msra.mxu0 0
  %1885 = vmatprep.subr.bf16.mxu0 0
  %1886 = vmatpush1.bf16.msra.mxu0 0
  %1887 = vmatprep.subr.bf16.mxu0 0
  %1888 = vmatpush1.bf16.msra.mxu0 0
  %1889 = vmatprep.subr.bf16.mxu0 0
  %1890 = vmatpush1.bf16.msra.mxu0 0
  %1891 = vmatprep.subr.bf16.mxu0 0
  %1892 = vmatpush1.bf16.msra.mxu0 0
  %1893 = vmatprep.subr.bf16.mxu0 0
  %1894 = vmatpush1.bf16.msra.mxu0 0
  %1895 = vmatprep.subr.bf16.mxu0 0
  %1896 = vmatpush1.bf16.msra.mxu0 0
  %1897 = vmatprep.subr.bf16.mxu0 0
  %1898 = vmatpush1.bf16.msra.mxu0 0
  %1899 = vmatprep.subr.bf16.mxu0 0
  %1900 = vmatpush1.bf16.msra.mxu0 0
  %1901 = vmatprep.subr.bf16.mxu0 0
  %1902 = vmatpush1.bf16.msra.mxu0 0
  %1903 = vmatprep.subr.bf16.mxu0 0
  %1904 = vmatpush1.bf16.msra.mxu0 0
  %1905 = vmatprep.subr.bf16.mxu0 0
  %1906 = vmatpush1.bf16.msra.mxu0 0
  %1907 = vmatprep.mubr.bf16.mxu0 0
  %1908 = vmatmul.mubr.bf16.gmra.mrb[0].mxu0 %v1873
  %v1909 = vpop.f32.mrb[0].mxu0
  %v1910 = vadd.f32 0.0, %v1909
  %v1911 = vpop.f32.mrb[0].mxu0
  %v1912 = vpop.f32.mrb[0].mxu0
  %v1913 = vadd.f32 0.0, %v1912
  %v1914 = vpop.f32.mrb[0].mxu0
  %1915 = vdwg.mxu0
  %v1916 = vadd.f32 %v155, %v1910
  %v1917 = vadd.f32 %v158, %v1913
  %v1918 = vld [vmem:[%s3 + $0xa] sm:$0x1]
  %v1919 = vlaneseq
  %v1920 = vshrl.u32 %v1919, 7
  %v1921 = vsub.s32 0, %v1920
  %v1922 = vrot.slane %v1918, %v1921
  %v1923 = vadd.f32 %v1916, %v1922
  %v1924 = vadd.f32 %v1917, %v1922
  %v1925 = vld [vmem:[%s3] sm:$0x1]
  %v1926 = vld [vmem:[%s3 + $0x1] sm:$0x1]
  %v1927 = vsel %vm163, %v1923, 0.0
  %1928 = vadd.xlane.f32.xlu0 %v1927
  %v1929 = vpop.xlane.xlu0 %1928
  %v1930 = vsel %vm163, %v1924, 0.0
  %1931 = vadd.xlane.f32.xlu0 %v1930
  %v1932 = vpop.xlane.xlu0 %1931
  %v1933 = vmul.f32 %v1929, %v170
  %v1934 = vmul.f32 %v1932, %v170
  %v1935 = vsub.f32 %v1923, %v1933
  %v1936 = vsub.f32 %v1924, %v1934
  %v1937 = vmul.f32 %v1935, %v1935
  %v1938 = vmul.f32 %v1936, %v1936
  %v1939 = vsel %vm163, %v1937, 0.0
  %1940 = vadd.xlane.f32.xlu0 %v1939
  %v1941 = vpop.xlane.xlu0 %1940
  %v1942 = vsel %vm163, %v1938, 0.0
  %1943 = vadd.xlane.f32.xlu0 %v1942
  %v1944 = vpop.xlane.xlu0 %1943
  %v1945 = vmul.f32 %v1941, %v170
  %v1946 = vmul.f32 %v1944, %v170
  %v1947 = vadd.f32 %v1945, 1e-05
  %v1948 = vadd.f32 %v1946, 1e-05
  %v1949 = vrsqrt.pop %v1947
  %v1950 = vrsqrt.pop %v1948
  %v1951 = vmul.f32 %v1935, %v1949
  %v1952 = vmul.f32 %v1936, %v1950
  %v1953 = vlaneseq
  %v1954 = vshrl.u32 %v1953, 7
  %v1955 = vsub.s32 0, %v1954
  %v1956 = vrot.slane %v1925, %v1955
  %v1957 = vmul.f32 %v1951, %v1956
  %v1958 = vmul.f32 %v1952, %v1956
  %v1959 = vlaneseq
  %v1960 = vshrl.u32 %v1959, 7
  %v1961 = vsub.s32 0, %v1960
  %v1962 = vrot.slane %v1926, %v1961
  %v1963 = vadd.f32 %v1957, %v1962
  %v1964 = vadd.f32 %v1958, %v1962
  %v1965 = vld [vmem:[%s9] sm:$0xf]
  %v1966 = vld [vmem:[%s9 + $0x4] sm:$0xf]
  %v1967 = vld [vmem:[%s9 + $0x8] sm:$0xf]
  %v1968 = vld [vmem:[%s9 + $0xc] sm:$0xf]
  %v1969 = vpack.c.bf16 %v1964, %v1963
  %v1970 = vld [vmem:[%s4] sm:$0x1]
  %v1972 = vlaneseq
  %v1973 = vshrl.u32 %v1972, 7
  %v1974 = vsub.s32 0, %v1973
  %v1975 = vrot.slane %v1970, %v1974
  %v1981 = vunpack.c.l.b16 %v1965
  %v1982 = vunpack.c.l.b16 %v1966
  %v1983 = vunpack.c.l.b16 %v1967
  %v1984 = vunpack.c.l.b16 %v1968
  %v1985 = vpack.c.b16 %v1982, %v1981
  %v1986 = vpack.c.b16 %v1984, %v1983
  %v1990 = vsel %vm163, %v1969, 0
  %1992 = vmatprep.subr.bf16.mxu0 0
  %1993 = vmatpush1.bf16.msra.mxu0 %v1985
  %1994 = vmatprep.subr.bf16.mxu0 0
  %1995 = vmatpush1.bf16.msra.mxu0 %v1986
  %1996 = vmatprep.subr.bf16.mxu0 0
  %1997 = vmatpush1.bf16.msra.mxu0 0
  %1998 = vmatprep.subr.bf16.mxu0 0
  %1999 = vmatpush1.bf16.msra.mxu0 0
  %2000 = vmatprep.subr.bf16.mxu0 0
  %2001 = vmatpush1.bf16.msra.mxu0 0
  %2002 = vmatprep.subr.bf16.mxu0 0
  %2003 = vmatpush1.bf16.msra.mxu0 0
  %2004 = vmatprep.subr.bf16.mxu0 0
  %2005 = vmatpush1.bf16.msra.mxu0 0
  %2006 = vmatprep.subr.bf16.mxu0 0
  %2007 = vmatpush1.bf16.msra.mxu0 0
  %2008 = vmatprep.subr.bf16.mxu0 0
  %2009 = vmatpush1.bf16.msra.mxu0 0
  %2010 = vmatprep.subr.bf16.mxu0 0
  %2011 = vmatpush1.bf16.msra.mxu0 0
  %2012 = vmatprep.subr.bf16.mxu0 0
  %2013 = vmatpush1.bf16.msra.mxu0 0
  %2014 = vmatprep.subr.bf16.mxu0 0
  %2015 = vmatpush1.bf16.msra.mxu0 0
  %2016 = vmatprep.subr.bf16.mxu0 0
  %2017 = vmatpush1.bf16.msra.mxu0 0
  %2018 = vmatprep.subr.bf16.mxu0 0
  %2019 = vmatpush1.bf16.msra.mxu0 0
  %2020 = vmatprep.subr.bf16.mxu0 0
  %2021 = vmatpush1.bf16.msra.mxu0 0
  %2022 = vmatprep.subr.bf16.mxu0 0
  %2023 = vmatpush1.bf16.msra.mxu0 0
  %2024 = vmatprep.mubr.bf16.mxu0 0
  %2025 = vmatmul.mubr.bf16.gmra.mrb[0].mxu0 %v1990
  %v2026 = vpop.f32.mrb[0].mxu0
  %v2027 = vadd.f32 %v1975, %v2026
  %v2028 = vpop.f32.mrb[0].mxu0
  %v2029 = vpop.f32.mrb[0].mxu0
  %v2030 = vadd.f32 %v1975, %v2029
  %v2031 = vpop.f32.mrb[0].mxu0
  %2032 = vdwg.mxu0
  %v2033 = vmul.f32 %v2027, 1.702
  %v2034 = vmul.f32 %v2030, 1.702
  %v2035 = vxor.u32 %v2033, 2147483648
  %v2036 = vxor.u32 %v2034, 2147483648
  %v2037 = vmul.f32 %v2035, 1.442695
  %v2038 = vpow.pop %v2037
  %v2039 = vmul.f32 %v2036, 1.442695
  %v2040 = vpow.pop %v2039
  %v2041 = vadd.f32 %v2038, 1.0
  %v2042 = vadd.f32 %v2040, 1.0
  %v2043 = vrcp.pop %v2041
  %v2044 = vmul.f32 1.0, %v2043
  %v2045 = vrcp.pop %v2042
  %v2046 = vmul.f32 1.0, %v2045
  %v2047 = vmul.f32 %v2027, %v2044
  %v2048 = vmul.f32 %v2030, %v2046
  %v2049 = vld [vmem:[%s10] sm:$0xf]
  %v2050 = vld [vmem:[%s10 + $0x4] sm:$0xf]
  %v2051 = vld [vmem:[%s10 + $0x8] sm:$0xf]
  %v2052 = vld [vmem:[%s10 + $0xc] sm:$0xf]
  %v2053 = vld [vmem:[%s10 + $0x10] sm:$0xf]
  %v2054 = vld [vmem:[%s10 + $0x14] sm:$0xf]
  %v2055 = vld [vmem:[%s10 + $0x18] sm:$0xf]
  %v2056 = vld [vmem:[%s10 + $0x1c] sm:$0xf]
  %v2057 = vld [vmem:[%s10 + $0x20] sm:$0xf]
  %v2058 = vld [vmem:[%s10 + $0x24] sm:$0xf]
  %v2059 = vld [vmem:[%s10 + $0x28] sm:$0xf]
  %v2060 = vld [vmem:[%s10 + $0x2c] sm:$0xf]
  %v2061 = vld [vmem:[%s10 + $0x30] sm:$0xf]
  %v2062 = vld [vmem:[%s10 + $0x34] sm:$0xf]
  %v2063 = vld [vmem:[%s10 + $0x38] sm:$0xf]
  %v2064 = vld [vmem:[%s10 + $0x3c] sm:$0xf]
  %v2065 = vpack.c.bf16 %v2048, %v2047
  %v2082 = vunpack.c.l.b16 %v2049
  %v2083 = vunpack.c.l.b16 %v2050
  %v2084 = vunpack.c.l.b16 %v2051
  %v2085 = vunpack.c.l.b16 %v2052
  %v2086 = vunpack.c.l.b16 %v2053
  %v2087 = vunpack.c.l.b16 %v2054
  %v2088 = vunpack.c.l.b16 %v2055
  %v2089 = vunpack.c.l.b16 %v2056
  %v2090 = vunpack.c.l.b16 %v2057
  %v2091 = vunpack.c.l.b16 %v2058
  %v2092 = vunpack.c.l.b16 %v2059
  %v2093 = vunpack.c.l.b16 %v2060
  %v2094 = vunpack.c.l.b16 %v2061
  %v2095 = vunpack.c.l.b16 %v2062
  %v2096 = vunpack.c.l.b16 %v2063
  %v2097 = vunpack.c.l.b16 %v2064
  %v2098 = vpack.c.b16 %v2083, %v2082
  %v2099 = vpack.c.b16 %v2085, %v2084
  %v2100 = vpack.c.b16 %v2087, %v2086
  %v2101 = vpack.c.b16 %v2089, %v2088
  %v2102 = vpack.c.b16 %v2091, %v2090
  %v2103 = vpack.c.b16 %v2093, %v2092
  %v2104 = vpack.c.b16 %v2095, %v2094
  %v2105 = vpack.c.b16 %v2097, %v2096
  %2114 = vmatprep.subr.bf16.mxu0 0
  %2115 = vmatpush1.bf16.msra.mxu0 %v2098
  %2116 = vmatprep.subr.bf16.mxu0 0
  %2117 = vmatpush1.bf16.msra.mxu0 %v2099
  %2118 = vmatprep.subr.bf16.mxu0 0
  %2119 = vmatpush1.bf16.msra.mxu0 %v2100
  %2120 = vmatprep.subr.bf16.mxu0 0
  %2121 = vmatpush1.bf16.msra.mxu0 %v2101
  %2122 = vmatprep.subr.bf16.mxu0 0
  %2123 = vmatpush1.bf16.msra.mxu0 %v2102
  %2124 = vmatprep.subr.bf16.mxu0 0
  %2125 = vmatpush1.bf16.msra.mxu0 %v2103
  %2126 = vmatprep.subr.bf16.mxu0 0
  %2127 = vmatpush1.bf16.msra.mxu0 %v2104
  %2128 = vmatprep.subr.bf16.mxu0 0
  %2129 = vmatpush1.bf16.msra.mxu0 %v2105
  %2130 = vmatprep.subr.bf16.mxu0 0
  %2131 = vmatpush1.bf16.msra.mxu0 0
  %2132 = vmatprep.subr.bf16.mxu0 0
  %2133 = vmatpush1.bf16.msra.mxu0 0
  %2134 = vmatprep.subr.bf16.mxu0 0
  %2135 = vmatpush1.bf16.msra.mxu0 0
  %2136 = vmatprep.subr.bf16.mxu0 0
  %2137 = vmatpush1.bf16.msra.mxu0 0
  %2138 = vmatprep.subr.bf16.mxu0 0
  %2139 = vmatpush1.bf16.msra.mxu0 0
  %2140 = vmatprep.subr.bf16.mxu0 0
  %2141 = vmatpush1.bf16.msra.mxu0 0
  %2142 = vmatprep.subr.bf16.mxu0 0
  %2143 = vmatpush1.bf16.msra.mxu0 0
  %2144 = vmatprep.subr.bf16.mxu0 0
  %2145 = vmatpush1.bf16.msra.mxu0 0
  %2146 = vmatprep.mubr.bf16.mxu0 0
  %2147 = vmatmul.mubr.bf16.gmra.mrb[0].mxu0 %v2065
  %v2148 = vpop.f32.mrb[0].mxu0
  %v2149 = vadd.f32 0.0, %v2148
  %v2150 = vpop.f32.mrb[0].mxu0
  %v2151 = vpop.f32.mrb[0].mxu0
  %v2152 = vadd.f32 0.0, %v2151
  %v2153 = vpop.f32.mrb[0].mxu0
  %2154 = vdwg.mxu0
  %v2155 = vadd.f32 %v1923, %v2149
  %v2156 = vadd.f32 %v1924, %v2152
  %v2157 = vld [vmem:[%s3 + $0xb] sm:$0x1]
  %v2158 = vlaneseq
  %v2159 = vshrl.u32 %v2158, 7
  %v2160 = vsub.s32 0, %v2159
  %v2161 = vrot.slane %v2157, %v2160
  %v2162 = vadd.f32 %v2155, %v2161
  %v2163 = vadd.f32 %v2156, %v2161
  %2164 = vst.msk [vmem:[%s11] sm:$0xff] %vm163, %v2162
  %2165 = vst.msk [vmem:[%s11 + $0x8] sm:$0xff] %vm163, %v2163
  // Predicated region
  $region46: #{extractor_forward.1} parent=0 // pred_check
    _
  $region47: #{extractor_forward.1} parent=0 // pred_check_branch
    %2167 = sbr.rel (0) target = $region49
  $region48: #{extractor_forward.1} parent=0 // pred_region
    _
  $region49: #{extractor_forward.1} parent=0 // pred_fallthru
    _
  // Predicated region
  $region50: #{extractor_forward.1} parent=0 // pred_check
    _
  $region51: #{extractor_forward.1} parent=0 // pred_check_branch
    %2169 = sbr.rel (0) target = $region53
  $region52: #{extractor_forward.1} parent=0 // pred_region
    _
  $region53: #{extractor_forward.1} parent=0 // pred_fallthru
    _

</llo_original>
